<compile_context>
chip_gen: v5e
topology: v5e:2x2
jax: 0.10.0
libtpu: 0.0.40
codegen_flags: <defaults>
</compile_context>

<pallas_src>
import functools

import jax
import jax.numpy as jnp
from jax.experimental import pallas as pl
from jax.experimental.pallas import tpu as pltpu

# ---- problem sizes (small, consistent with the module's semantics) ----------
BATCH = 4        # numex
BEAM = 2         # beamsize
HIDDEN = 128     # synthetic TransitionModel state width (lane-aligned)
VOCAB = 128      # number of actions (power of two, lane-aligned)
MAXSTEPS = 6     # self.maxsteps (kept small for the demo)
LANE = 128       # lane width of the per-step trace output slabs

INACTIVE = 1e9   # cost of inactive beams at step 0 (emulates the single start state)


# -----------------------------------------------------------------------------
# Fused decode kernel — single invocation runs the whole decode loop.
#   resident inputs : h0   (K*B, H)     initial hidden, row = k*B + b     (f32)
#                     wu   (H, V+H)     shared [W | U] weight             (bf16)
#                     bias (K*B, V)     action bias, tiled over rows      (f32)
#                     emb  (V, H)       action embeddings                 (bf16)
#   outputs         : trace_cost (T, K*B, 128)  new beam costs (lane-broadcast)
#                     trace_idx  (T, K*B, 128)  parent*V + action per new beam
# -----------------------------------------------------------------------------
def _fused_decode_kernel(h0_ref, wu_ref, bias_ref, emb_ref,
                         trace_cost_ref, trace_idx_ref,
                         *, beamsize, batch, vocab, hidden, maxsteps):
    K, B, V, H = beamsize, batch, vocab, hidden
    R = K * B
    v_log2 = V.bit_length() - 1                     # V is a power of two
    idx_bits = (K * V - 1).bit_length()             # bits needed for candidate ids
    idx_mask = jnp.int32((1 << idx_bits) - 1)
    val_mask = jnp.int32(-(1 << idx_bits))          # keep high (value) bits
    int_max = jnp.int32(jnp.iinfo(jnp.int32).max)

    # Resident operands — loaded once, reused across all steps.
    wu = wu_ref[...]                                # (H, V+H)  bf16
    bias = bias_ref[...]                            # (R, V)    f32
    emb = emb_ref[...]                              # (V, H)    bf16

    row = jax.lax.broadcasted_iota(jnp.int32, (R, 1), 0)         # row id  k*B + b
    lane_v = jax.lax.broadcasted_iota(jnp.int32, (R, V), 1)      # action id per lane
    beam_of_row = jnp.zeros((R, 1), jnp.int32)                   # k = row // B (no vdiv)
    for j in range(1, K):
        beam_of_row = beam_of_row + (row >= j * B).astype(jnp.int32)
    cand_grid = beam_of_row * V + lane_v                         # candidate id k*V + v

    # Carried beam state (vreg-resident loop carries, no VMEM round-trips).
    h = h0_ref[...]                                              # (R, H) f32
    # beam 0 starts at cost 0; other beams "inactive" (first-step branch of the
    # original module: global top-k of a single distribution).
    cost = jnp.where(row < B, 0.0, INACTIVE).astype(jnp.float32)  # (R, 1)

    for t in range(maxsteps):   # fully unrolled; the recurrence is strictly serial
        # ---- one fused MXU pass per step: [logits | h @ U] -------------------
        out = jnp.dot(h.astype(jnp.bfloat16), wu,
                      preferred_element_type=jnp.float32)        # (R, V+H) f32
        logits = out[:, :V] + bias                               # (R, V)
        hU = out[:, V:]                                          # (R, H)

        # per-(beam, example) logsumexp → candidate cumulative cost (>= 0)
        m = jnp.max(logits, axis=-1, keepdims=True)
        lse = m + jnp.log(jnp.sum(jnp.exp(logits - m), axis=-1, keepdims=True))
        total = (cost + lse) - logits                            # (R, V)

        # fused value+index sort key: for non-negative finite f32, the int32 bit
        # pattern is monotone; the low idx_bits of the mantissa are replaced by
        # the candidate id (ties break to lowest parent beam / lowest action id;
        # value perturbation <= ~2^-15 relative).
        key = (pltpu.bitcast(total, jnp.int32) & val_mask) | cand_grid

        # ---- global top-K per example: one lane reduction per selected slot --
        sel_keys = []
        work = key
        for i in range(K):
            rowmin = jnp.min(work, axis=-1, keepdims=True)       # (R, 1)
            exmin = rowmin[0:B]                                  # combine beam rows
            for j in range(1, K):
                exmin = jnp.minimum(exmin, rowmin[j * B:(j + 1) * B])  # (B, 1)
            sel_keys.append(exmin)
            if i + 1 < K:                                        # mask out selection
                key_full = jnp.concatenate([exmin] * K, axis=0)  # (R, 1)
                work = jnp.where(work == key_full, int_max, work)

        sel_key = jnp.concatenate(sel_keys, axis=0)              # (R,1) row = i*B + b
        sel_idx = sel_key & idx_mask                             # parent*V + action
        new_cost = pltpu.bitcast(sel_key & val_mask, jnp.float32)
        parent = sel_idx >> v_log2                               # (R, 1) in [0, K)
        action = sel_idx & (V - 1)                               # (R, 1) in [0, V)

        # ---- batched recurrence (hoisted out of the selection loop) ----------
        # parent hidden @ U: sublane-group select from the fused matmul output
        hU_sel = jnp.concatenate([hU[0:B]] * K, axis=0)          # parent == 0 default
        for j in range(1, K):
            cand_hu = jnp.concatenate([hU[j * B:(j + 1) * B]] * K, axis=0)
            hU_sel = jnp.where(parent == j, cand_hu, hU_sel)
        # action embedding gather as ONE one-hot MXU matmul for all new beams
        onehot = (lane_v == action).astype(emb.dtype)            # (R, V) bf16
        emb_sel = jnp.dot(onehot, emb, preferred_element_type=jnp.float32)
        h = jnp.tanh(hU_sel + emb_sel)                           # (R, H) f32
        cost = new_cost

        # ---- per-step traces: full (8,128) unmasked tile stores ---------------
        trace_cost_ref[t] = jnp.broadcast_to(new_cost, (R, LANE))
        trace_idx_ref[t] = jnp.broadcast_to(sel_idx, (R, LANE))


# -----------------------------------------------------------------------------
# Host wrapper: build the shared [W|U] weights once, call the kernel once for
# the whole decode, unpack the traces.
# -----------------------------------------------------------------------------
def beam_decode(params, h0, beamsize, maxsteps):
    w, b, u, emb = params                    # f32: (H,V), (1,V), (H,H), (V,H)
    B, H = h0.shape
    Hw, V = w.shape
    K = beamsize
    R = K * B
    assert Hw == H and u.shape == (H, H) and emb.shape == (V, H)
    assert V & (V - 1) == 0, "VOCAB must be a power of two"
    assert H % 128 == 0 and V % 128 == 0 and R % 8 == 0
    assert (K * V - 1).bit_length() <= 10, "candidate-id bits must stay small"

    wu = jnp.concatenate([w, u], axis=1).astype(jnp.bfloat16)    # (H, V+H) shared weights
    bias_t = jnp.tile(b.astype(jnp.float32), (R, 1))             # (R, V)
    emb_q = emb.astype(jnp.bfloat16)                             # (V, H)
    h0_ex = jnp.tile(h0.astype(jnp.float32), (K, 1))             # (R, H), row = k*B + b

    kernel = functools.partial(_fused_decode_kernel, beamsize=K, batch=B,
                               vocab=V, hidden=H, maxsteps=maxsteps)
    trace_cost, trace_idx = pl.pallas_call(
        kernel,
        out_shape=(jax.ShapeDtypeStruct((maxsteps, R, LANE), jnp.float32),
                   jax.ShapeDtypeStruct((maxsteps, R, LANE), jnp.int32)),
        grid=(1,),                                                # single invocation
        in_specs=[
            pl.BlockSpec((R, H), lambda i: (0, 0)),               # h0
            pl.BlockSpec((H, V + H), lambda i: (0, 0)),           # [W|U]
            pl.BlockSpec((R, V), lambda i: (0, 0)),               # bias
            pl.BlockSpec((V, H), lambda i: (0, 0)),               # emb
        ],
        out_specs=(
            pl.BlockSpec((maxsteps, R, LANE), lambda i: (0, 0, 0)),
            pl.BlockSpec((maxsteps, R, LANE), lambda i: (0, 0, 0)),
        ),
        compiler_params=pltpu.CompilerParams(
            dimension_semantics=("arbitrary",)),
    )(h0_ex, wu, bias_t, emb_q)

    # ---- unpack traces: rows are i*B + b (new beam slot i, example b) --------
    v_log2 = V.bit_length() - 1
    sel = trace_idx[:, :, 0].reshape(maxsteps, K, B)              # (T, K, B)
    cost_t = trace_cost[:, :, 0].reshape(maxsteps, K, B)          # (T, K, B)
    actions = jnp.transpose(sel & (V - 1), (2, 1, 0))             # (B, K, T)
    backptrs = jnp.transpose(sel >> v_log2, (2, 1, 0))            # (B, K, T)
    step_costs = jnp.transpose(cost_t, (2, 1, 0))                 # (B, K, T)
    probs = step_costs[:, :, -1]                                  # (B, K) final beam costs
    return {
        "probs": probs,                 # all_out_probs (cumulative -log p per beam)
        "output_probs": probs[:, 0],    # best-beam cumulative -log p per example
        "actions": actions,
        "backpointers": backptrs,
        "step_costs": step_costs,
    }


# -----------------------------------------------------------------------------
# Pure-JAX references for verification (mirror the kernel's bf16/f32 numerics).
# -----------------------------------------------------------------------------
def _first_step_topk_ref(params, h0, beamsize):
    """Top-K of the first-step -log softmax (the module's first branch)."""
    w, b, _, _ = params
    wq = w.astype(jnp.bfloat16)
    logits = jnp.einsum('bh,hv->bv', h0.astype(jnp.bfloat16), wq,
                        preferred_element_type=jnp.float32) + b[0]
    m = jnp.max(logits, axis=-1, keepdims=True)
    lse = m + jnp.log(jnp.sum(jnp.exp(logits - m), axis=-1, keepdims=True))
    nll = lse - logits
    neg_top, _ = jax.lax.top_k(-nll, beamsize)
    return -neg_top                                      # (B, K), ascending costs


def _path_costs_ref(params, h0, actions, backptrs, beamsize):
    """Replay the kernel-chosen (action, backpointer) path and recompute costs."""
    w, b, u, emb = params
    wq, uq, embq = (w.astype(jnp.bfloat16), u.astype(jnp.bfloat16),
                    emb.astype(jnp.bfloat16))
    B, _ = h0.shape
    K = beamsize
    steps = actions.shape[-1]
    h = jnp.tile(h0[:, None, :], (1, K, 1)).astype(jnp.float32)       # (B, K, H)
    cost = jnp.concatenate([jnp.zeros((B, 1), jnp.float32),
                            jnp.full((B, K - 1), INACTIVE, jnp.float32)], axis=1)
    bidx = jnp.arange(B)[:, None]
    out = []
    for t in range(steps):
        logits = jnp.einsum('bkh,hv->bkv', h.astype(jnp.bfloat16), wq,
                            preferred_element_type=jnp.float32) + b[0]
        m = jnp.max(logits, axis=-1, keepdims=True)
        lse = m + jnp.log(jnp.sum(jnp.exp(logits - m), axis=-1, keepdims=True))
        par = backptrs[:, :, t]                                       # (B, K)
        act = actions[:, :, t]                                        # (B, K)
        cost_par = jnp.take_along_axis(cost, par, axis=1)
        lse_par = jnp.take_along_axis(lse[:, :, 0], par, axis=1)
        logit_sel = logits[bidx, par, act]
        newcost = (cost_par + lse_par) - logit_sel
        h_par = jnp.take_along_axis(h, par[:, :, None], axis=1)       # (B, K, H)
        hU = jnp.einsum('bkh,hd->bkd', h_par.astype(jnp.bfloat16), uq,
                        preferred_element_type=jnp.float32)
        h = jnp.tanh(hU + embq[act].astype(jnp.float32))
        cost = newcost
        out.append(newcost)
    return jnp.stack(out, axis=-1)                                    # (B, K, steps)


if __name__ == "__main__":
    key = jax.random.PRNGKey(0)
    kw, kb, ku, ke, kh = jax.random.split(key, 5)
    w = jax.random.normal(kw, (HIDDEN, VOCAB), jnp.float32) * 0.1
    b = jax.random.normal(kb, (1, VOCAB), jnp.float32) * 0.1
    u = jax.random.normal(ku, (HIDDEN, HIDDEN), jnp.float32) * 0.1
    emb = jax.random.normal(ke, (VOCAB, HIDDEN), jnp.float32) * 0.1
    h0 = jax.random.normal(kh, (BATCH, HIDDEN), jnp.float32)
    params = (w, b, u, emb)

    out = beam_decode(params, h0, BEAM, MAXSTEPS)
    jax.block_until_ready(out)

    # ---- shape / sanity checks ------------------------------------------------
    assert out["probs"].shape == (BATCH, BEAM)
    assert out["actions"].shape == (BATCH, BEAM, MAXSTEPS)
    assert out["backpointers"].shape == (BATCH, BEAM, MAXSTEPS)
    assert bool(jnp.all(jnp.isfinite(out["probs"])))
    assert bool(jnp.all((out["actions"] >= 0) & (out["actions"] < VOCAB)))
    assert bool(jnp.all((out["backpointers"] >= 0) & (out["backpointers"] < BEAM)))
    sc = out["step_costs"]
    # beams are emitted in increasing cumulative-cost order at every step
    assert bool(jnp.all(sc[:, :-1, :] <= sc[:, 1:, :] + 1e-4))

    # ---- numeric checks against pure-JAX references ---------------------------
    # (a) step-0 beam costs == top-K of the first-step -log softmax
    ref0 = _first_step_topk_ref(params, h0, BEAM)
    assert bool(jnp.allclose(sc[:, :, 0], ref0, rtol=1e-3, atol=1e-3))
    # (b) reported cumulative costs are consistent with the kernel's own chosen
    #     actions/backpointers when replayed with a pure-JAX recurrence
    ref_costs = _path_costs_ref(params, h0, out["actions"], out["backpointers"], BEAM)
    assert bool(jnp.allclose(sc, ref_costs, rtol=1e-2, atol=1e-2))

    print("KERNEL_OK")
</pallas_src>

<mosaic_0001>
module attributes {stable_mosaic.version = 11 : i64} {
  func.func @_fused_decode_kernel(%arg0: i32, %arg1: memref<8x128xf32, #tpu.memory_space<vmem>>, %arg2: memref<128x256xbf16, #tpu.memory_space<vmem>>, %arg3: memref<8x128xf32, #tpu.memory_space<vmem>>, %arg4: memref<128x128xbf16, #tpu.memory_space<vmem>>, %arg5: memref<6x8x128xf32, #tpu.memory_space<vmem>>, %arg6: memref<6x8x128xi32, #tpu.memory_space<vmem>>) attributes {dimension_semantics = [#tpu.dimension_semantics<arbitrary>], iteration_bounds = array<i64: 1>, scalar_prefetch = 0 : i64, scratch_operands = 0 : i64, tpu.core_type = #tpu.core_type<tc>, window_params = [{pipeline_mode = #tpu.pipeline_mode<synchronous>, transform_indices = @transform_0, window_bounds = array<i64: 8, 128>}, {pipeline_mode = #tpu.pipeline_mode<synchronous>, transform_indices = @transform_1, window_bounds = array<i64: 128, 256>}, {pipeline_mode = #tpu.pipeline_mode<synchronous>, transform_indices = @transform_2, window_bounds = array<i64: 8, 128>}, {pipeline_mode = #tpu.pipeline_mode<synchronous>, transform_indices = @transform_3, window_bounds = array<i64: 128, 128>}, {pipeline_mode = #tpu.pipeline_mode<synchronous>, transform_indices = @transform_4, window_bounds = array<i64: 6, 8, 128>}, {pipeline_mode = #tpu.pipeline_mode<synchronous>, transform_indices = @transform_5, window_bounds = array<i64: 6, 8, 128>}]} {
    %c0 = arith.constant 0 : index
    %c0_0 = arith.constant 0 : index
    %0 = vector.load %arg2[%c0, %c0_0] : memref<128x256xbf16, #tpu.memory_space<vmem>>, vector<128x256xbf16>
    %c0_1 = arith.constant 0 : index
    %c0_2 = arith.constant 0 : index
    %1 = vector.load %arg3[%c0_1, %c0_2] : memref<8x128xf32, #tpu.memory_space<vmem>>, vector<8x128xf32>
    %c0_3 = arith.constant 0 : index
    %c0_4 = arith.constant 0 : index
    %2 = vector.load %arg4[%c0_3, %c0_4] : memref<128x128xbf16, #tpu.memory_space<vmem>>, vector<128x128xbf16>
    %3 = tpu.iota {dimensions = array<i32: 0>} : vector<8x1xi32>
    %4 = tpu.iota {dimensions = array<i32: 1>} : vector<8x128xi32>
    %c0_i32 = arith.constant 0 : i32
    %5 = vector.broadcast %c0_i32 : i32 to vector<8x1xi32>
    %c4_i32 = arith.constant 4 : i32
    %6 = vector.broadcast %c4_i32 : i32 to vector<8x1xi32>
    %7 = arith.cmpi sge, %3, %6 : vector<8x1xi32>
    %8 = arith.extui %7 : vector<8x1xi1> to vector<8x1xi32>
    %9 = arith.addi %5, %8 : vector<8x1xi32>
    %c128_i32 = arith.constant 128 : i32
    %10 = vector.broadcast %c128_i32 : i32 to vector<8x1xi32>
    %11 = arith.muli %9, %10 : vector<8x1xi32>
    %12 = vector.broadcast %11 : vector<8x1xi32> to vector<8x128xi32>
    %13 = arith.addi %12, %4 : vector<8x128xi32>
    %c0_5 = arith.constant 0 : index
    %c0_6 = arith.constant 0 : index
    %14 = vector.load %arg1[%c0_5, %c0_6] : memref<8x128xf32, #tpu.memory_space<vmem>>, vector<8x128xf32>
    %c4_i32_7 = arith.constant 4 : i32
    %15 = vector.broadcast %c4_i32_7 : i32 to vector<8x1xi32>
    %16 = arith.cmpi slt, %3, %15 : vector<8x1xi32>
    %cst = arith.constant 0.000000e+00 : f32
    %cst_8 = arith.constant 1.000000e+09 : f32
    %17 = vector.broadcast %cst : f32 to vector<8x1xf32>
    %18 = vector.broadcast %cst_8 : f32 to vector<8x1xf32>
    %19 = arith.select %16, %17, %18 : vector<8x1xi1>, vector<8x1xf32>
    %20 = arith.truncf %14 : vector<8x128xf32> to vector<8x128xbf16>
    %cst_9 = arith.constant dense<0.000000e+00> : vector<8x256xf32>
    %21 = tpu.matmul %20, %0, %cst_9 {dimension_numbers = #tpu.dot_dimension_numbers<[1], [0], [0], [1], [0, 0, 1, 1], [], []>} : vector<8x128xbf16>, vector<128x256xbf16>, vector<8x256xf32> -> vector<8x256xf32>
    %22 = vector.extract_strided_slice %21 {offsets = [0, 0], sizes = [8, 128], strides = [1, 1]} : vector<8x256xf32> to vector<8x128xf32>
    %23 = arith.addf %22, %1 : vector<8x128xf32>
    %24 = vector.extract_strided_slice %21 {offsets = [0, 128], sizes = [8, 128], strides = [1, 1]} : vector<8x256xf32> to vector<8x128xf32>
    %cst_10 = arith.constant dense<0xFF800000> : vector<8xf32>
    %25 = vector.multi_reduction <maximumf>, %23, %cst_10 [1] : vector<8x128xf32> to vector<8xf32>
    %26 = vector.shape_cast %25 : vector<8xf32> to vector<8x1xf32>
    %27 = vector.broadcast %26 : vector<8x1xf32> to vector<8x128xf32>
    %28 = arith.subf %23, %27 : vector<8x128xf32>
    %29 = math.exp %28 : vector<8x128xf32>
    %cst_11 = arith.constant dense<0.000000e+00> : vector<8xf32>
    %30 = vector.multi_reduction <add>, %29, %cst_11 [1] : vector<8x128xf32> to vector<8xf32>
    %31 = vector.shape_cast %30 : vector<8xf32> to vector<8x1xf32>
    %32 = math.log %31 : vector<8x1xf32>
    %33 = arith.addf %26, %32 : vector<8x1xf32>
    %34 = arith.addf %19, %33 : vector<8x1xf32>
    %35 = vector.broadcast %34 : vector<8x1xf32> to vector<8x128xf32>
    %36 = arith.subf %35, %23 : vector<8x128xf32>
    %37 = tpu.bitcast %36 : vector<8x128xf32> -> vector<8x128xi32>
    %c-256_i32 = arith.constant -256 : i32
    %38 = vector.broadcast %c-256_i32 : i32 to vector<8x128xi32>
    %39 = arith.andi %37, %38 : vector<8x128xi32>
    %40 = arith.ori %39, %13 : vector<8x128xi32>
    %cst_12 = arith.constant dense<2147483647> : vector<8xi32>
    %41 = vector.multi_reduction <minsi>, %40, %cst_12 [1] : vector<8x128xi32> to vector<8xi32>
    %42 = vector.shape_cast %41 : vector<8xi32> to vector<8x1xi32>
    %43 = vector.extract_strided_slice %42 {offsets = [0, 0], sizes = [4, 1], strides = [1, 1]} : vector<8x1xi32> to vector<4x1xi32>
    %44 = vector.extract_strided_slice %42 {offsets = [4, 0], sizes = [4, 1], strides = [1, 1]} : vector<8x1xi32> to vector<4x1xi32>
    %45 = arith.minsi %43, %44 : vector<4x1xi32>
    %46 = tpu.concatenate %45, %45 in 0 : vector<4x1xi32>, vector<4x1xi32> -> vector<8x1xi32>
    %47 = vector.broadcast %46 : vector<8x1xi32> to vector<8x128xi32>
    %48 = arith.cmpi eq, %40, %47 : vector<8x128xi32>
    %c2147483647_i32 = arith.constant 2147483647 : i32
    %49 = vector.broadcast %c2147483647_i32 : i32 to vector<8x128xi32>
    %50 = arith.select %48, %49, %40 : vector<8x128xi1>, vector<8x128xi32>
    %cst_13 = arith.constant dense<2147483647> : vector<8xi32>
    %51 = vector.multi_reduction <minsi>, %50, %cst_13 [1] : vector<8x128xi32> to vector<8xi32>
    %52 = vector.shape_cast %51 : vector<8xi32> to vector<8x1xi32>
    %53 = vector.extract_strided_slice %52 {offsets = [0, 0], sizes = [4, 1], strides = [1, 1]} : vector<8x1xi32> to vector<4x1xi32>
    %54 = vector.extract_strided_slice %52 {offsets = [4, 0], sizes = [4, 1], strides = [1, 1]} : vector<8x1xi32> to vector<4x1xi32>
    %55 = arith.minsi %53, %54 : vector<4x1xi32>
    %56 = tpu.concatenate %45, %55 in 0 : vector<4x1xi32>, vector<4x1xi32> -> vector<8x1xi32>
    %c255_i32 = arith.constant 255 : i32
    %57 = vector.broadcast %c255_i32 : i32 to vector<8x1xi32>
    %58 = arith.andi %56, %57 : vector<8x1xi32>
    %c-256_i32_14 = arith.constant -256 : i32
    %59 = vector.broadcast %c-256_i32_14 : i32 to vector<8x1xi32>
    %60 = arith.andi %56, %59 : vector<8x1xi32>
    %61 = tpu.bitcast %60 : vector<8x1xi32> -> vector<8x1xf32>
    %c7_i32 = arith.constant 7 : i32
    %62 = vector.broadcast %c7_i32 : i32 to vector<8x1xi32>
    %63 = arith.shrsi %58, %62 : vector<8x1xi32>
    %c127_i32 = arith.constant 127 : i32
    %64 = vector.broadcast %c127_i32 : i32 to vector<8x1xi32>
    %65 = arith.andi %58, %64 : vector<8x1xi32>
    %66 = vector.extract_strided_slice %24 {offsets = [0, 0], sizes = [4, 128], strides = [1, 1]} : vector<8x128xf32> to vector<4x128xf32>
    %67 = tpu.concatenate %66, %66 in 0 : vector<4x128xf32>, vector<4x128xf32> -> vector<8x128xf32>
    %68 = vector.extract_strided_slice %24 {offsets = [4, 0], sizes = [4, 128], strides = [1, 1]} : vector<8x128xf32> to vector<4x128xf32>
    %69 = tpu.concatenate %68, %68 in 0 : vector<4x128xf32>, vector<4x128xf32> -> vector<8x128xf32>
    %c1_i32 = arith.constant 1 : i32
    %70 = vector.broadcast %c1_i32 : i32 to vector<8x1xi32>
    %71 = arith.cmpi eq, %63, %70 : vector<8x1xi32>
    %72 = vector.shape_cast %71 : vector<8x1xi1> to vector<8x1xi1>
    %73 = vector.broadcast %72 : vector<8x1xi1> to vector<8x128xi1>
    %74 = arith.select %73, %69, %67 : vector<8x128xi1>, vector<8x128xf32>
    %75 = vector.broadcast %65 : vector<8x1xi32> to vector<8x128xi32>
    %76 = arith.cmpi eq, %4, %75 : vector<8x128xi32>
    %77 = arith.extui %76 : vector<8x128xi1> to vector<8x128xi32>
    %78 = arith.sitofp %77 : vector<8x128xi32> to vector<8x128xf32>
    %79 = arith.truncf %78 : vector<8x128xf32> to vector<8x128xbf16>
    %cst_15 = arith.constant dense<0.000000e+00> : vector<8x128xf32>
    %80 = tpu.matmul %79, %2, %cst_15 {dimension_numbers = #tpu.dot_dimension_numbers<[1], [0], [0], [1], [0, 0, 1, 1], [], []>} : vector<8x128xbf16>, vector<128x128xbf16>, vector<8x128xf32> -> vector<8x128xf32>
    %81 = arith.addf %74, %80 : vector<8x128xf32>
    %82 = math.tanh %81 : vector<8x128xf32>
    %83 = vector.shape_cast %61 : vector<8x1xf32> to vector<8x1xf32>
    %84 = vector.broadcast %83 : vector<8x1xf32> to vector<8x128xf32>
    %c0_16 = arith.constant 0 : index
    %c0_17 = arith.constant 0 : index
    %c0_18 = arith.constant 0 : index
    %85 = vector.load %arg5[%c0_16, %c0_17, %c0_18] : memref<6x8x128xf32, #tpu.memory_space<vmem>>, vector<1x8x128xf32>
    %86 = vector.shape_cast %85 : vector<1x8x128xf32> to vector<8x128xf32>
    %87 = vector.shape_cast %84 : vector<8x128xf32> to vector<1x8x128xf32>
    tpu.vector_store %arg5[%c0_16, %c0_17, %c0_18], %87 {strides = array<i32>} : memref<6x8x128xf32, #tpu.memory_space<vmem>>, vector<1x8x128xf32>,
    %88 = vector.shape_cast %58 : vector<8x1xi32> to vector<8x1xi32>
    %89 = vector.broadcast %88 : vector<8x1xi32> to vector<8x128xi32>
    %c0_19 = arith.constant 0 : index
    %c0_20 = arith.constant 0 : index
    %c0_21 = arith.constant 0 : index
    %90 = vector.load %arg6[%c0_19, %c0_20, %c0_21] : memref<6x8x128xi32, #tpu.memory_space<vmem>>, vector<1x8x128xi32>
    %91 = vector.shape_cast %90 : vector<1x8x128xi32> to vector<8x128xi32>
    %92 = vector.shape_cast %89 : vector<8x128xi32> to vector<1x8x128xi32>
    tpu.vector_store %arg6[%c0_19, %c0_20, %c0_21], %92 {strides = array<i32>} : memref<6x8x128xi32, #tpu.memory_space<vmem>>, vector<1x8x128xi32>,
    %93 = arith.truncf %82 : vector<8x128xf32> to vector<8x128xbf16>
    %cst_22 = arith.constant dense<0.000000e+00> : vector<8x256xf32>
    %94 = tpu.matmul %93, %0, %cst_22 {dimension_numbers = #tpu.dot_dimension_numbers<[1], [0], [0], [1], [0, 0, 1, 1], [], []>} : vector<8x128xbf16>, vector<128x256xbf16>, vector<8x256xf32> -> vector<8x256xf32>
    %95 = vector.extract_strided_slice %94 {offsets = [0, 0], sizes = [8, 128], strides = [1, 1]} : vector<8x256xf32> to vector<8x128xf32>
    %96 = arith.addf %95, %1 : vector<8x128xf32>
    %97 = vector.extract_strided_slice %94 {offsets = [0, 128], sizes = [8, 128], strides = [1, 1]} : vector<8x256xf32> to vector<8x128xf32>
    %cst_23 = arith.constant dense<0xFF800000> : vector<8xf32>
    %98 = vector.multi_reduction <maximumf>, %96, %cst_23 [1] : vector<8x128xf32> to vector<8xf32>
    %99 = vector.shape_cast %98 : vector<8xf32> to vector<8x1xf32>
    %100 = vector.broadcast %99 : vector<8x1xf32> to vector<8x128xf32>
    %101 = arith.subf %96, %100 : vector<8x128xf32>
    %102 = math.exp %101 : vector<8x128xf32>
    %cst_24 = arith.constant dense<0.000000e+00> : vector<8xf32>
    %103 = vector.multi_reduction <add>, %102, %cst_24 [1] : vector<8x128xf32> to vector<8xf32>
    %104 = vector.shape_cast %103 : vector<8xf32> to vector<8x1xf32>
    %105 = math.log %104 : vector<8x1xf32>
    %106 = arith.addf %99, %105 : vector<8x1xf32>
    %107 = arith.addf %61, %106 : vector<8x1xf32>
    %108 = vector.broadcast %107 : vector<8x1xf32> to vector<8x128xf32>
    %109 = arith.subf %108, %96 : vector<8x128xf32>
    %110 = tpu.bitcast %109 : vector<8x128xf32> -> vector<8x128xi32>
    %c-256_i32_25 = arith.constant -256 : i32
    %111 = vector.broadcast %c-256_i32_25 : i32 to vector<8x128xi32>
    %112 = arith.andi %110, %111 : vector<8x128xi32>
    %113 = arith.ori %112, %13 : vector<8x128xi32>
    %cst_26 = arith.constant dense<2147483647> : vector<8xi32>
    %114 = vector.multi_reduction <minsi>, %113, %cst_26 [1] : vector<8x128xi32> to vector<8xi32>
    %115 = vector.shape_cast %114 : vector<8xi32> to vector<8x1xi32>
    %116 = vector.extract_strided_slice %115 {offsets = [0, 0], sizes = [4, 1], strides = [1, 1]} : vector<8x1xi32> to vector<4x1xi32>
    %117 = vector.extract_strided_slice %115 {offsets = [4, 0], sizes = [4, 1], strides = [1, 1]} : vector<8x1xi32> to vector<4x1xi32>
    %118 = arith.minsi %116, %117 : vector<4x1xi32>
    %119 = tpu.concatenate %118, %118 in 0 : vector<4x1xi32>, vector<4x1xi32> -> vector<8x1xi32>
    %120 = vector.broadcast %119 : vector<8x1xi32> to vector<8x128xi32>
    %121 = arith.cmpi eq, %113, %120 : vector<8x128xi32>
    %c2147483647_i32_27 = arith.constant 2147483647 : i32
    %122 = vector.broadcast %c2147483647_i32_27 : i32 to vector<8x128xi32>
    %123 = arith.select %121, %122, %113 : vector<8x128xi1>, vector<8x128xi32>
    %cst_28 = arith.constant dense<2147483647> : vector<8xi32>
    %124 = vector.multi_reduction <minsi>, %123, %cst_28 [1] : vector<8x128xi32> to vector<8xi32>
    %125 = vector.shape_cast %124 : vector<8xi32> to vector<8x1xi32>
    %126 = vector.extract_strided_slice %125 {offsets = [0, 0], sizes = [4, 1], strides = [1, 1]} : vector<8x1xi32> to vector<4x1xi32>
    %127 = vector.extract_strided_slice %125 {offsets = [4, 0], sizes = [4, 1], strides = [1, 1]} : vector<8x1xi32> to vector<4x1xi32>
    %128 = arith.minsi %126, %127 : vector<4x1xi32>
    %129 = tpu.concatenate %118, %128 in 0 : vector<4x1xi32>, vector<4x1xi32> -> vector<8x1xi32>
    %c255_i32_29 = arith.constant 255 : i32
    %130 = vector.broadcast %c255_i32_29 : i32 to vector<8x1xi32>
    %131 = arith.andi %129, %130 : vector<8x1xi32>
    %c-256_i32_30 = arith.constant -256 : i32
    %132 = vector.broadcast %c-256_i32_30 : i32 to vector<8x1xi32>
    %133 = arith.andi %129, %132 : vector<8x1xi32>
    %134 = tpu.bitcast %133 : vector<8x1xi32> -> vector<8x1xf32>
    %c7_i32_31 = arith.constant 7 : i32
    %135 = vector.broadcast %c7_i32_31 : i32 to vector<8x1xi32>
    %136 = arith.shrsi %131, %135 : vector<8x1xi32>
    %c127_i32_32 = arith.constant 127 : i32
    %137 = vector.broadcast %c127_i32_32 : i32 to vector<8x1xi32>
    %138 = arith.andi %131, %137 : vector<8x1xi32>
    %139 = vector.extract_strided_slice %97 {offsets = [0, 0], sizes = [4, 128], strides = [1, 1]} : vector<8x128xf32> to vector<4x128xf32>
    %140 = tpu.concatenate %139, %139 in 0 : vector<4x128xf32>, vector<4x128xf32> -> vector<8x128xf32>
    %141 = vector.extract_strided_slice %97 {offsets = [4, 0], sizes = [4, 128], strides = [1, 1]} : vector<8x128xf32> to vector<4x128xf32>
    %142 = tpu.concatenate %141, %141 in 0 : vector<4x128xf32>, vector<4x128xf32> -> vector<8x128xf32>
    %c1_i32_33 = arith.constant 1 : i32
    %143 = vector.broadcast %c1_i32_33 : i32 to vector<8x1xi32>
    %144 = arith.cmpi eq, %136, %143 : vector<8x1xi32>
    %145 = vector.shape_cast %144 : vector<8x1xi1> to vector<8x1xi1>
    %146 = vector.broadcast %145 : vector<8x1xi1> to vector<8x128xi1>
    %147 = arith.select %146, %142, %140 : vector<8x128xi1>, vector<8x128xf32>
    %148 = vector.broadcast %138 : vector<8x1xi32> to vector<8x128xi32>
    %149 = arith.cmpi eq, %4, %148 : vector<8x128xi32>
    %150 = arith.extui %149 : vector<8x128xi1> to vector<8x128xi32>
    %151 = arith.sitofp %150 : vector<8x128xi32> to vector<8x128xf32>
    %152 = arith.truncf %151 : vector<8x128xf32> to vector<8x128xbf16>
    %cst_34 = arith.constant dense<0.000000e+00> : vector<8x128xf32>
    %153 = tpu.matmul %152, %2, %cst_34 {dimension_numbers = #tpu.dot_dimension_numbers<[1], [0], [0], [1], [0, 0, 1, 1], [], []>} : vector<8x128xbf16>, vector<128x128xbf16>, vector<8x128xf32> -> vector<8x128xf32>
    %154 = arith.addf %147, %153 : vector<8x128xf32>
    %155 = math.tanh %154 : vector<8x128xf32>
    %156 = vector.shape_cast %134 : vector<8x1xf32> to vector<8x1xf32>
    %157 = vector.broadcast %156 : vector<8x1xf32> to vector<8x128xf32>
    %c1 = arith.constant 1 : index
    %c0_35 = arith.constant 0 : index
    %c0_36 = arith.constant 0 : index
    %158 = vector.load %arg5[%c1, %c0_35, %c0_36] : memref<6x8x128xf32, #tpu.memory_space<vmem>>, vector<1x8x128xf32>
    %159 = vector.shape_cast %158 : vector<1x8x128xf32> to vector<8x128xf32>
    %160 = vector.shape_cast %157 : vector<8x128xf32> to vector<1x8x128xf32>
    tpu.vector_store %arg5[%c1, %c0_35, %c0_36], %160 {strides = array<i32>} : memref<6x8x128xf32, #tpu.memory_space<vmem>>, vector<1x8x128xf32>,
    %161 = vector.shape_cast %131 : vector<8x1xi32> to vector<8x1xi32>
    %162 = vector.broadcast %161 : vector<8x1xi32> to vector<8x128xi32>
    %c1_37 = arith.constant 1 : index
    %c0_38 = arith.constant 0 : index
    %c0_39 = arith.constant 0 : index
    %163 = vector.load %arg6[%c1_37, %c0_38, %c0_39] : memref<6x8x128xi32, #tpu.memory_space<vmem>>, vector<1x8x128xi32>
    %164 = vector.shape_cast %163 : vector<1x8x128xi32> to vector<8x128xi32>
    %165 = vector.shape_cast %162 : vector<8x128xi32> to vector<1x8x128xi32>
    tpu.vector_store %arg6[%c1_37, %c0_38, %c0_39], %165 {strides = array<i32>} : memref<6x8x128xi32, #tpu.memory_space<vmem>>, vector<1x8x128xi32>,
    %166 = arith.truncf %155 : vector<8x128xf32> to vector<8x128xbf16>
    %cst_40 = arith.constant dense<0.000000e+00> : vector<8x256xf32>
    %167 = tpu.matmul %166, %0, %cst_40 {dimension_numbers = #tpu.dot_dimension_numbers<[1], [0], [0], [1], [0, 0, 1, 1], [], []>} : vector<8x128xbf16>, vector<128x256xbf16>, vector<8x256xf32> -> vector<8x256xf32>
    %168 = vector.extract_strided_slice %167 {offsets = [0, 0], sizes = [8, 128], strides = [1, 1]} : vector<8x256xf32> to vector<8x128xf32>
    %169 = arith.addf %168, %1 : vector<8x128xf32>
    %170 = vector.extract_strided_slice %167 {offsets = [0, 128], sizes = [8, 128], strides = [1, 1]} : vector<8x256xf32> to vector<8x128xf32>
    %cst_41 = arith.constant dense<0xFF800000> : vector<8xf32>
    %171 = vector.multi_reduction <maximumf>, %169, %cst_41 [1] : vector<8x128xf32> to vector<8xf32>
    %172 = vector.shape_cast %171 : vector<8xf32> to vector<8x1xf32>
    %173 = vector.broadcast %172 : vector<8x1xf32> to vector<8x128xf32>
    %174 = arith.subf %169, %173 : vector<8x128xf32>
    %175 = math.exp %174 : vector<8x128xf32>
    %cst_42 = arith.constant dense<0.000000e+00> : vector<8xf32>
    %176 = vector.multi_reduction <add>, %175, %cst_42 [1] : vector<8x128xf32> to vector<8xf32>
    %177 = vector.shape_cast %176 : vector<8xf32> to vector<8x1xf32>
    %178 = math.log %177 : vector<8x1xf32>
    %179 = arith.addf %172, %178 : vector<8x1xf32>
    %180 = arith.addf %134, %179 : vector<8x1xf32>
    %181 = vector.broadcast %180 : vector<8x1xf32> to vector<8x128xf32>
    %182 = arith.subf %181, %169 : vector<8x128xf32>
    %183 = tpu.bitcast %182 : vector<8x128xf32> -> vector<8x128xi32>
    %c-256_i32_43 = arith.constant -256 : i32
    %184 = vector.broadcast %c-256_i32_43 : i32 to vector<8x128xi32>
    %185 = arith.andi %183, %184 : vector<8x128xi32>
    %186 = arith.ori %185, %13 : vector<8x128xi32>
    %cst_44 = arith.constant dense<2147483647> : vector<8xi32>
    %187 = vector.multi_reduction <minsi>, %186, %cst_44 [1] : vector<8x128xi32> to vector<8xi32>
    %188 = vector.shape_cast %187 : vector<8xi32> to vector<8x1xi32>
    %189 = vector.extract_strided_slice %188 {offsets = [0, 0], sizes = [4, 1], strides = [1, 1]} : vector<8x1xi32> to vector<4x1xi32>
    %190 = vector.extract_strided_slice %188 {offsets = [4, 0], sizes = [4, 1], strides = [1, 1]} : vector<8x1xi32> to vector<4x1xi32>
    %191 = arith.minsi %189, %190 : vector<4x1xi32>
    %192 = tpu.concatenate %191, %191 in 0 : vector<4x1xi32>, vector<4x1xi32> -> vector<8x1xi32>
    %193 = vector.broadcast %192 : vector<8x1xi32> to vector<8x128xi32>
    %194 = arith.cmpi eq, %186, %193 : vector<8x128xi32>
    %c2147483647_i32_45 = arith.constant 2147483647 : i32
    %195 = vector.broadcast %c2147483647_i32_45 : i32 to vector<8x128xi32>
    %196 = arith.select %194, %195, %186 : vector<8x128xi1>, vector<8x128xi32>
    %cst_46 = arith.constant dense<2147483647> : vector<8xi32>
    %197 = vector.multi_reduction <minsi>, %196, %cst_46 [1] : vector<8x128xi32> to vector<8xi32>
    %198 = vector.shape_cast %197 : vector<8xi32> to vector<8x1xi32>
    %199 = vector.extract_strided_slice %198 {offsets = [0, 0], sizes = [4, 1], strides = [1, 1]} : vector<8x1xi32> to vector<4x1xi32>
    %200 = vector.extract_strided_slice %198 {offsets = [4, 0], sizes = [4, 1], strides = [1, 1]} : vector<8x1xi32> to vector<4x1xi32>
    %201 = arith.minsi %199, %200 : vector<4x1xi32>
    %202 = tpu.concatenate %191, %201 in 0 : vector<4x1xi32>, vector<4x1xi32> -> vector<8x1xi32>
    %c255_i32_47 = arith.constant 255 : i32
    %203 = vector.broadcast %c255_i32_47 : i32 to vector<8x1xi32>
    %204 = arith.andi %202, %203 : vector<8x1xi32>
    %c-256_i32_48 = arith.constant -256 : i32
    %205 = vector.broadcast %c-256_i32_48 : i32 to vector<8x1xi32>
    %206 = arith.andi %202, %205 : vector<8x1xi32>
    %207 = tpu.bitcast %206 : vector<8x1xi32> -> vector<8x1xf32>
    %c7_i32_49 = arith.constant 7 : i32
    %208 = vector.broadcast %c7_i32_49 : i32 to vector<8x1xi32>
    %209 = arith.shrsi %204, %208 : vector<8x1xi32>
    %c127_i32_50 = arith.constant 127 : i32
    %210 = vector.broadcast %c127_i32_50 : i32 to vector<8x1xi32>
    %211 = arith.andi %204, %210 : vector<8x1xi32>
    %212 = vector.extract_strided_slice %170 {offsets = [0, 0], sizes = [4, 128], strides = [1, 1]} : vector<8x128xf32> to vector<4x128xf32>
    %213 = tpu.concatenate %212, %212 in 0 : vector<4x128xf32>, vector<4x128xf32> -> vector<8x128xf32>
    %214 = vector.extract_strided_slice %170 {offsets = [4, 0], sizes = [4, 128], strides = [1, 1]} : vector<8x128xf32> to vector<4x128xf32>
    %215 = tpu.concatenate %214, %214 in 0 : vector<4x128xf32>, vector<4x128xf32> -> vector<8x128xf32>
    %c1_i32_51 = arith.constant 1 : i32
    %216 = vector.broadcast %c1_i32_51 : i32 to vector<8x1xi32>
    %217 = arith.cmpi eq, %209, %216 : vector<8x1xi32>
    %218 = vector.shape_cast %217 : vector<8x1xi1> to vector<8x1xi1>
    %219 = vector.broadcast %218 : vector<8x1xi1> to vector<8x128xi1>
    %220 = arith.select %219, %215, %213 : vector<8x128xi1>, vector<8x128xf32>
    %221 = vector.broadcast %211 : vector<8x1xi32> to vector<8x128xi32>
    %222 = arith.cmpi eq, %4, %221 : vector<8x128xi32>
    %223 = arith.extui %222 : vector<8x128xi1> to vector<8x128xi32>
    %224 = arith.sitofp %223 : vector<8x128xi32> to vector<8x128xf32>
    %225 = arith.truncf %224 : vector<8x128xf32> to vector<8x128xbf16>
    %cst_52 = arith.constant dense<0.000000e+00> : vector<8x128xf32>
    %226 = tpu.matmul %225, %2, %cst_52 {dimension_numbers = #tpu.dot_dimension_numbers<[1], [0], [0], [1], [0, 0, 1, 1], [], []>} : vector<8x128xbf16>, vector<128x128xbf16>, vector<8x128xf32> -> vector<8x128xf32>
    %227 = arith.addf %220, %226 : vector<8x128xf32>
    %228 = math.tanh %227 : vector<8x128xf32>
    %229 = vector.shape_cast %207 : vector<8x1xf32> to vector<8x1xf32>
    %230 = vector.broadcast %229 : vector<8x1xf32> to vector<8x128xf32>
    %c2 = arith.constant 2 : index
    %c0_53 = arith.constant 0 : index
    %c0_54 = arith.constant 0 : index
    %231 = vector.load %arg5[%c2, %c0_53, %c0_54] : memref<6x8x128xf32, #tpu.memory_space<vmem>>, vector<1x8x128xf32>
    %232 = vector.shape_cast %231 : vector<1x8x128xf32> to vector<8x128xf32>
    %233 = vector.shape_cast %230 : vector<8x128xf32> to vector<1x8x128xf32>
    tpu.vector_store %arg5[%c2, %c0_53, %c0_54], %233 {strides = array<i32>} : memref<6x8x128xf32, #tpu.memory_space<vmem>>, vector<1x8x128xf32>,
    %234 = vector.shape_cast %204 : vector<8x1xi32> to vector<8x1xi32>
    %235 = vector.broadcast %234 : vector<8x1xi32> to vector<8x128xi32>
    %c2_55 = arith.constant 2 : index
    %c0_56 = arith.constant 0 : index
    %c0_57 = arith.constant 0 : index
    %236 = vector.load %arg6[%c2_55, %c0_56, %c0_57] : memref<6x8x128xi32, #tpu.memory_space<vmem>>, vector<1x8x128xi32>
    %237 = vector.shape_cast %236 : vector<1x8x128xi32> to vector<8x128xi32>
    %238 = vector.shape_cast %235 : vector<8x128xi32> to vector<1x8x128xi32>
    tpu.vector_store %arg6[%c2_55, %c0_56, %c0_57], %238 {strides = array<i32>} : memref<6x8x128xi32, #tpu.memory_space<vmem>>, vector<1x8x128xi32>,
    %239 = arith.truncf %228 : vector<8x128xf32> to vector<8x128xbf16>
    %cst_58 = arith.constant dense<0.000000e+00> : vector<8x256xf32>
    %240 = tpu.matmul %239, %0, %cst_58 {dimension_numbers = #tpu.dot_dimension_numbers<[1], [0], [0], [1], [0, 0, 1, 1], [], []>} : vector<8x128xbf16>, vector<128x256xbf16>, vector<8x256xf32> -> vector<8x256xf32>
    %241 = vector.extract_strided_slice %240 {offsets = [0, 0], sizes = [8, 128], strides = [1, 1]} : vector<8x256xf32> to vector<8x128xf32>
    %242 = arith.addf %241, %1 : vector<8x128xf32>
    %243 = vector.extract_strided_slice %240 {offsets = [0, 128], sizes = [8, 128], strides = [1, 1]} : vector<8x256xf32> to vector<8x128xf32>
    %cst_59 = arith.constant dense<0xFF800000> : vector<8xf32>
    %244 = vector.multi_reduction <maximumf>, %242, %cst_59 [1] : vector<8x128xf32> to vector<8xf32>
    %245 = vector.shape_cast %244 : vector<8xf32> to vector<8x1xf32>
    %246 = vector.broadcast %245 : vector<8x1xf32> to vector<8x128xf32>
    %247 = arith.subf %242, %246 : vector<8x128xf32>
    %248 = math.exp %247 : vector<8x128xf32>
    %cst_60 = arith.constant dense<0.000000e+00> : vector<8xf32>
    %249 = vector.multi_reduction <add>, %248, %cst_60 [1] : vector<8x128xf32> to vector<8xf32>
    %250 = vector.shape_cast %249 : vector<8xf32> to vector<8x1xf32>
    %251 = math.log %250 : vector<8x1xf32>
    %252 = arith.addf %245, %251 : vector<8x1xf32>
    %253 = arith.addf %207, %252 : vector<8x1xf32>
    %254 = vector.broadcast %253 : vector<8x1xf32> to vector<8x128xf32>
    %255 = arith.subf %254, %242 : vector<8x128xf32>
    %256 = tpu.bitcast %255 : vector<8x128xf32> -> vector<8x128xi32>
    %c-256_i32_61 = arith.constant -256 : i32
    %257 = vector.broadcast %c-256_i32_61 : i32 to vector<8x128xi32>
    %258 = arith.andi %256, %257 : vector<8x128xi32>
    %259 = arith.ori %258, %13 : vector<8x128xi32>
    %cst_62 = arith.constant dense<2147483647> : vector<8xi32>
    %260 = vector.multi_reduction <minsi>, %259, %cst_62 [1] : vector<8x128xi32> to vector<8xi32>
    %261 = vector.shape_cast %260 : vector<8xi32> to vector<8x1xi32>
    %262 = vector.extract_strided_slice %261 {offsets = [0, 0], sizes = [4, 1], strides = [1, 1]} : vector<8x1xi32> to vector<4x1xi32>
    %263 = vector.extract_strided_slice %261 {offsets = [4, 0], sizes = [4, 1], strides = [1, 1]} : vector<8x1xi32> to vector<4x1xi32>
    %264 = arith.minsi %262, %263 : vector<4x1xi32>
    %265 = tpu.concatenate %264, %264 in 0 : vector<4x1xi32>, vector<4x1xi32> -> vector<8x1xi32>
    %266 = vector.broadcast %265 : vector<8x1xi32> to vector<8x128xi32>
    %267 = arith.cmpi eq, %259, %266 : vector<8x128xi32>
    %c2147483647_i32_63 = arith.constant 2147483647 : i32
    %268 = vector.broadcast %c2147483647_i32_63 : i32 to vector<8x128xi32>
    %269 = arith.select %267, %268, %259 : vector<8x128xi1>, vector<8x128xi32>
    %cst_64 = arith.constant dense<2147483647> : vector<8xi32>
    %270 = vector.multi_reduction <minsi>, %269, %cst_64 [1] : vector<8x128xi32> to vector<8xi32>
    %271 = vector.shape_cast %270 : vector<8xi32> to vector<8x1xi32>
    %272 = vector.extract_strided_slice %271 {offsets = [0, 0], sizes = [4, 1], strides = [1, 1]} : vector<8x1xi32> to vector<4x1xi32>
    %273 = vector.extract_strided_slice %271 {offsets = [4, 0], sizes = [4, 1], strides = [1, 1]} : vector<8x1xi32> to vector<4x1xi32>
    %274 = arith.minsi %272, %273 : vector<4x1xi32>
    %275 = tpu.concatenate %264, %274 in 0 : vector<4x1xi32>, vector<4x1xi32> -> vector<8x1xi32>
    %c255_i32_65 = arith.constant 255 : i32
    %276 = vector.broadcast %c255_i32_65 : i32 to vector<8x1xi32>
    %277 = arith.andi %275, %276 : vector<8x1xi32>
    %c-256_i32_66 = arith.constant -256 : i32
    %278 = vector.broadcast %c-256_i32_66 : i32 to vector<8x1xi32>
    %279 = arith.andi %275, %278 : vector<8x1xi32>
    %280 = tpu.bitcast %279 : vector<8x1xi32> -> vector<8x1xf32>
    %c7_i32_67 = arith.constant 7 : i32
    %281 = vector.broadcast %c7_i32_67 : i32 to vector<8x1xi32>
    %282 = arith.shrsi %277, %281 : vector<8x1xi32>
    %c127_i32_68 = arith.constant 127 : i32
    %283 = vector.broadcast %c127_i32_68 : i32 to vector<8x1xi32>
    %284 = arith.andi %277, %283 : vector<8x1xi32>
    %285 = vector.extract_strided_slice %243 {offsets = [0, 0], sizes = [4, 128], strides = [1, 1]} : vector<8x128xf32> to vector<4x128xf32>
    %286 = tpu.concatenate %285, %285 in 0 : vector<4x128xf32>, vector<4x128xf32> -> vector<8x128xf32>
    %287 = vector.extract_strided_slice %243 {offsets = [4, 0], sizes = [4, 128], strides = [1, 1]} : vector<8x128xf32> to vector<4x128xf32>
    %288 = tpu.concatenate %287, %287 in 0 : vector<4x128xf32>, vector<4x128xf32> -> vector<8x128xf32>
    %c1_i32_69 = arith.constant 1 : i32
    %289 = vector.broadcast %c1_i32_69 : i32 to vector<8x1xi32>
    %290 = arith.cmpi eq, %282, %289 : vector<8x1xi32>
    %291 = vector.shape_cast %290 : vector<8x1xi1> to vector<8x1xi1>
    %292 = vector.broadcast %291 : vector<8x1xi1> to vector<8x128xi1>
    %293 = arith.select %292, %288, %286 : vector<8x128xi1>, vector<8x128xf32>
    %294 = vector.broadcast %284 : vector<8x1xi32> to vector<8x128xi32>
    %295 = arith.cmpi eq, %4, %294 : vector<8x128xi32>
    %296 = arith.extui %295 : vector<8x128xi1> to vector<8x128xi32>
    %297 = arith.sitofp %296 : vector<8x128xi32> to vector<8x128xf32>
    %298 = arith.truncf %297 : vector<8x128xf32> to vector<8x128xbf16>
    %cst_70 = arith.constant dense<0.000000e+00> : vector<8x128xf32>
    %299 = tpu.matmul %298, %2, %cst_70 {dimension_numbers = #tpu.dot_dimension_numbers<[1], [0], [0], [1], [0, 0, 1, 1], [], []>} : vector<8x128xbf16>, vector<128x128xbf16>, vector<8x128xf32> -> vector<8x128xf32>
    %300 = arith.addf %293, %299 : vector<8x128xf32>
    %301 = math.tanh %300 : vector<8x128xf32>
    %302 = vector.shape_cast %280 : vector<8x1xf32> to vector<8x1xf32>
    %303 = vector.broadcast %302 : vector<8x1xf32> to vector<8x128xf32>
    %c3 = arith.constant 3 : index
    %c0_71 = arith.constant 0 : index
    %c0_72 = arith.constant 0 : index
    %304 = vector.load %arg5[%c3, %c0_71, %c0_72] : memref<6x8x128xf32, #tpu.memory_space<vmem>>, vector<1x8x128xf32>
    %305 = vector.shape_cast %304 : vector<1x8x128xf32> to vector<8x128xf32>
    %306 = vector.shape_cast %303 : vector<8x128xf32> to vector<1x8x128xf32>
    tpu.vector_store %arg5[%c3, %c0_71, %c0_72], %306 {strides = array<i32>} : memref<6x8x128xf32, #tpu.memory_space<vmem>>, vector<1x8x128xf32>,
    %307 = vector.shape_cast %277 : vector<8x1xi32> to vector<8x1xi32>
    %308 = vector.broadcast %307 : vector<8x1xi32> to vector<8x128xi32>
    %c3_73 = arith.constant 3 : index
    %c0_74 = arith.constant 0 : index
    %c0_75 = arith.constant 0 : index
    %309 = vector.load %arg6[%c3_73, %c0_74, %c0_75] : memref<6x8x128xi32, #tpu.memory_space<vmem>>, vector<1x8x128xi32>
    %310 = vector.shape_cast %309 : vector<1x8x128xi32> to vector<8x128xi32>
    %311 = vector.shape_cast %308 : vector<8x128xi32> to vector<1x8x128xi32>
    tpu.vector_store %arg6[%c3_73, %c0_74, %c0_75], %311 {strides = array<i32>} : memref<6x8x128xi32, #tpu.memory_space<vmem>>, vector<1x8x128xi32>,
    %312 = arith.truncf %301 : vector<8x128xf32> to vector<8x128xbf16>
    %cst_76 = arith.constant dense<0.000000e+00> : vector<8x256xf32>
    %313 = tpu.matmul %312, %0, %cst_76 {dimension_numbers = #tpu.dot_dimension_numbers<[1], [0], [0], [1], [0, 0, 1, 1], [], []>} : vector<8x128xbf16>, vector<128x256xbf16>, vector<8x256xf32> -> vector<8x256xf32>
    %314 = vector.extract_strided_slice %313 {offsets = [0, 0], sizes = [8, 128], strides = [1, 1]} : vector<8x256xf32> to vector<8x128xf32>
    %315 = arith.addf %314, %1 : vector<8x128xf32>
    %316 = vector.extract_strided_slice %313 {offsets = [0, 128], sizes = [8, 128], strides = [1, 1]} : vector<8x256xf32> to vector<8x128xf32>
    %cst_77 = arith.constant dense<0xFF800000> : vector<8xf32>
    %317 = vector.multi_reduction <maximumf>, %315, %cst_77 [1] : vector<8x128xf32> to vector<8xf32>
    %318 = vector.shape_cast %317 : vector<8xf32> to vector<8x1xf32>
    %319 = vector.broadcast %318 : vector<8x1xf32> to vector<8x128xf32>
    %320 = arith.subf %315, %319 : vector<8x128xf32>
    %321 = math.exp %320 : vector<8x128xf32>
    %cst_78 = arith.constant dense<0.000000e+00> : vector<8xf32>
    %322 = vector.multi_reduction <add>, %321, %cst_78 [1] : vector<8x128xf32> to vector<8xf32>
    %323 = vector.shape_cast %322 : vector<8xf32> to vector<8x1xf32>
    %324 = math.log %323 : vector<8x1xf32>
    %325 = arith.addf %318, %324 : vector<8x1xf32>
    %326 = arith.addf %280, %325 : vector<8x1xf32>
    %327 = vector.broadcast %326 : vector<8x1xf32> to vector<8x128xf32>
    %328 = arith.subf %327, %315 : vector<8x128xf32>
    %329 = tpu.bitcast %328 : vector<8x128xf32> -> vector<8x128xi32>
    %c-256_i32_79 = arith.constant -256 : i32
    %330 = vector.broadcast %c-256_i32_79 : i32 to vector<8x128xi32>
    %331 = arith.andi %329, %330 : vector<8x128xi32>
    %332 = arith.ori %331, %13 : vector<8x128xi32>
    %cst_80 = arith.constant dense<2147483647> : vector<8xi32>
    %333 = vector.multi_reduction <minsi>, %332, %cst_80 [1] : vector<8x128xi32> to vector<8xi32>
    %334 = vector.shape_cast %333 : vector<8xi32> to vector<8x1xi32>
    %335 = vector.extract_strided_slice %334 {offsets = [0, 0], sizes = [4, 1], strides = [1, 1]} : vector<8x1xi32> to vector<4x1xi32>
    %336 = vector.extract_strided_slice %334 {offsets = [4, 0], sizes = [4, 1], strides = [1, 1]} : vector<8x1xi32> to vector<4x1xi32>
    %337 = arith.minsi %335, %336 : vector<4x1xi32>
    %338 = tpu.concatenate %337, %337 in 0 : vector<4x1xi32>, vector<4x1xi32> -> vector<8x1xi32>
    %339 = vector.broadcast %338 : vector<8x1xi32> to vector<8x128xi32>
    %340 = arith.cmpi eq, %332, %339 : vector<8x128xi32>
    %c2147483647_i32_81 = arith.constant 2147483647 : i32
    %341 = vector.broadcast %c2147483647_i32_81 : i32 to vector<8x128xi32>
    %342 = arith.select %340, %341, %332 : vector<8x128xi1>, vector<8x128xi32>
    %cst_82 = arith.constant dense<2147483647> : vector<8xi32>
    %343 = vector.multi_reduction <minsi>, %342, %cst_82 [1] : vector<8x128xi32> to vector<8xi32>
    %344 = vector.shape_cast %343 : vector<8xi32> to vector<8x1xi32>
    %345 = vector.extract_strided_slice %344 {offsets = [0, 0], sizes = [4, 1], strides = [1, 1]} : vector<8x1xi32> to vector<4x1xi32>
    %346 = vector.extract_strided_slice %344 {offsets = [4, 0], sizes = [4, 1], strides = [1, 1]} : vector<8x1xi32> to vector<4x1xi32>
    %347 = arith.minsi %345, %346 : vector<4x1xi32>
    %348 = tpu.concatenate %337, %347 in 0 : vector<4x1xi32>, vector<4x1xi32> -> vector<8x1xi32>
    %c255_i32_83 = arith.constant 255 : i32
    %349 = vector.broadcast %c255_i32_83 : i32 to vector<8x1xi32>
    %350 = arith.andi %348, %349 : vector<8x1xi32>
    %c-256_i32_84 = arith.constant -256 : i32
    %351 = vector.broadcast %c-256_i32_84 : i32 to vector<8x1xi32>
    %352 = arith.andi %348, %351 : vector<8x1xi32>
    %353 = tpu.bitcast %352 : vector<8x1xi32> -> vector<8x1xf32>
    %c7_i32_85 = arith.constant 7 : i32
    %354 = vector.broadcast %c7_i32_85 : i32 to vector<8x1xi32>
    %355 = arith.shrsi %350, %354 : vector<8x1xi32>
    %c127_i32_86 = arith.constant 127 : i32
    %356 = vector.broadcast %c127_i32_86 : i32 to vector<8x1xi32>
    %357 = arith.andi %350, %356 : vector<8x1xi32>
    %358 = vector.extract_strided_slice %316 {offsets = [0, 0], sizes = [4, 128], strides = [1, 1]} : vector<8x128xf32> to vector<4x128xf32>
    %359 = tpu.concatenate %358, %358 in 0 : vector<4x128xf32>, vector<4x128xf32> -> vector<8x128xf32>
    %360 = vector.extract_strided_slice %316 {offsets = [4, 0], sizes = [4, 128], strides = [1, 1]} : vector<8x128xf32> to vector<4x128xf32>
    %361 = tpu.concatenate %360, %360 in 0 : vector<4x128xf32>, vector<4x128xf32> -> vector<8x128xf32>
    %c1_i32_87 = arith.constant 1 : i32
    %362 = vector.broadcast %c1_i32_87 : i32 to vector<8x1xi32>
    %363 = arith.cmpi eq, %355, %362 : vector<8x1xi32>
    %364 = vector.shape_cast %363 : vector<8x1xi1> to vector<8x1xi1>
    %365 = vector.broadcast %364 : vector<8x1xi1> to vector<8x128xi1>
    %366 = arith.select %365, %361, %359 : vector<8x128xi1>, vector<8x128xf32>
    %367 = vector.broadcast %357 : vector<8x1xi32> to vector<8x128xi32>
    %368 = arith.cmpi eq, %4, %367 : vector<8x128xi32>
    %369 = arith.extui %368 : vector<8x128xi1> to vector<8x128xi32>
    %370 = arith.sitofp %369 : vector<8x128xi32> to vector<8x128xf32>
    %371 = arith.truncf %370 : vector<8x128xf32> to vector<8x128xbf16>
    %cst_88 = arith.constant dense<0.000000e+00> : vector<8x128xf32>
    %372 = tpu.matmul %371, %2, %cst_88 {dimension_numbers = #tpu.dot_dimension_numbers<[1], [0], [0], [1], [0, 0, 1, 1], [], []>} : vector<8x128xbf16>, vector<128x128xbf16>, vector<8x128xf32> -> vector<8x128xf32>
    %373 = arith.addf %366, %372 : vector<8x128xf32>
    %374 = math.tanh %373 : vector<8x128xf32>
    %375 = vector.shape_cast %353 : vector<8x1xf32> to vector<8x1xf32>
    %376 = vector.broadcast %375 : vector<8x1xf32> to vector<8x128xf32>
    %c4 = arith.constant 4 : index
    %c0_89 = arith.constant 0 : index
    %c0_90 = arith.constant 0 : index
    %377 = vector.load %arg5[%c4, %c0_89, %c0_90] : memref<6x8x128xf32, #tpu.memory_space<vmem>>, vector<1x8x128xf32>
    %378 = vector.shape_cast %377 : vector<1x8x128xf32> to vector<8x128xf32>
    %379 = vector.shape_cast %376 : vector<8x128xf32> to vector<1x8x128xf32>
    tpu.vector_store %arg5[%c4, %c0_89, %c0_90], %379 {strides = array<i32>} : memref<6x8x128xf32, #tpu.memory_space<vmem>>, vector<1x8x128xf32>,
    %380 = vector.shape_cast %350 : vector<8x1xi32> to vector<8x1xi32>
    %381 = vector.broadcast %380 : vector<8x1xi32> to vector<8x128xi32>
    %c4_91 = arith.constant 4 : index
    %c0_92 = arith.constant 0 : index
    %c0_93 = arith.constant 0 : index
    %382 = vector.load %arg6[%c4_91, %c0_92, %c0_93] : memref<6x8x128xi32, #tpu.memory_space<vmem>>, vector<1x8x128xi32>
    %383 = vector.shape_cast %382 : vector<1x8x128xi32> to vector<8x128xi32>
    %384 = vector.shape_cast %381 : vector<8x128xi32> to vector<1x8x128xi32>
    tpu.vector_store %arg6[%c4_91, %c0_92, %c0_93], %384 {strides = array<i32>} : memref<6x8x128xi32, #tpu.memory_space<vmem>>, vector<1x8x128xi32>,
    %385 = arith.truncf %374 : vector<8x128xf32> to vector<8x128xbf16>
    %cst_94 = arith.constant dense<0.000000e+00> : vector<8x256xf32>
    %386 = tpu.matmul %385, %0, %cst_94 {dimension_numbers = #tpu.dot_dimension_numbers<[1], [0], [0], [1], [0, 0, 1, 1], [], []>} : vector<8x128xbf16>, vector<128x256xbf16>, vector<8x256xf32> -> vector<8x256xf32>
    %387 = vector.extract_strided_slice %386 {offsets = [0, 0], sizes = [8, 128], strides = [1, 1]} : vector<8x256xf32> to vector<8x128xf32>
    %388 = arith.addf %387, %1 : vector<8x128xf32>
    %cst_95 = arith.constant dense<0xFF800000> : vector<8xf32>
    %389 = vector.multi_reduction <maximumf>, %388, %cst_95 [1] : vector<8x128xf32> to vector<8xf32>
    %390 = vector.shape_cast %389 : vector<8xf32> to vector<8x1xf32>
    %391 = vector.broadcast %390 : vector<8x1xf32> to vector<8x128xf32>
    %392 = arith.subf %388, %391 : vector<8x128xf32>
    %393 = math.exp %392 : vector<8x128xf32>
    %cst_96 = arith.constant dense<0.000000e+00> : vector<8xf32>
    %394 = vector.multi_reduction <add>, %393, %cst_96 [1] : vector<8x128xf32> to vector<8xf32>
    %395 = vector.shape_cast %394 : vector<8xf32> to vector<8x1xf32>
    %396 = math.log %395 : vector<8x1xf32>
    %397 = arith.addf %390, %396 : vector<8x1xf32>
    %398 = arith.addf %353, %397 : vector<8x1xf32>
    %399 = vector.broadcast %398 : vector<8x1xf32> to vector<8x128xf32>
    %400 = arith.subf %399, %388 : vector<8x128xf32>
    %401 = tpu.bitcast %400 : vector<8x128xf32> -> vector<8x128xi32>
    %c-256_i32_97 = arith.constant -256 : i32
    %402 = vector.broadcast %c-256_i32_97 : i32 to vector<8x128xi32>
    %403 = arith.andi %401, %402 : vector<8x128xi32>
    %404 = arith.ori %403, %13 : vector<8x128xi32>
    %cst_98 = arith.constant dense<2147483647> : vector<8xi32>
    %405 = vector.multi_reduction <minsi>, %404, %cst_98 [1] : vector<8x128xi32> to vector<8xi32>
    %406 = vector.shape_cast %405 : vector<8xi32> to vector<8x1xi32>
    %407 = vector.extract_strided_slice %406 {offsets = [0, 0], sizes = [4, 1], strides = [1, 1]} : vector<8x1xi32> to vector<4x1xi32>
    %408 = vector.extract_strided_slice %406 {offsets = [4, 0], sizes = [4, 1], strides = [1, 1]} : vector<8x1xi32> to vector<4x1xi32>
    %409 = arith.minsi %407, %408 : vector<4x1xi32>
    %410 = tpu.concatenate %409, %409 in 0 : vector<4x1xi32>, vector<4x1xi32> -> vector<8x1xi32>
    %411 = vector.broadcast %410 : vector<8x1xi32> to vector<8x128xi32>
    %412 = arith.cmpi eq, %404, %411 : vector<8x128xi32>
    %c2147483647_i32_99 = arith.constant 2147483647 : i32
    %413 = vector.broadcast %c2147483647_i32_99 : i32 to vector<8x128xi32>
    %414 = arith.select %412, %413, %404 : vector<8x128xi1>, vector<8x128xi32>
    %cst_100 = arith.constant dense<2147483647> : vector<8xi32>
    %415 = vector.multi_reduction <minsi>, %414, %cst_100 [1] : vector<8x128xi32> to vector<8xi32>
    %416 = vector.shape_cast %415 : vector<8xi32> to vector<8x1xi32>
    %417 = vector.extract_strided_slice %416 {offsets = [0, 0], sizes = [4, 1], strides = [1, 1]} : vector<8x1xi32> to vector<4x1xi32>
    %418 = vector.extract_strided_slice %416 {offsets = [4, 0], sizes = [4, 1], strides = [1, 1]} : vector<8x1xi32> to vector<4x1xi32>
    %419 = arith.minsi %417, %418 : vector<4x1xi32>
    %420 = tpu.concatenate %409, %419 in 0 : vector<4x1xi32>, vector<4x1xi32> -> vector<8x1xi32>
    %c255_i32_101 = arith.constant 255 : i32
    %421 = vector.broadcast %c255_i32_101 : i32 to vector<8x1xi32>
    %422 = arith.andi %420, %421 : vector<8x1xi32>
    %c-256_i32_102 = arith.constant -256 : i32
    %423 = vector.broadcast %c-256_i32_102 : i32 to vector<8x1xi32>
    %424 = arith.andi %420, %423 : vector<8x1xi32>
    %425 = tpu.bitcast %424 : vector<8x1xi32> -> vector<8x1xf32>
    %426 = vector.shape_cast %425 : vector<8x1xf32> to vector<8x1xf32>
    %427 = vector.broadcast %426 : vector<8x1xf32> to vector<8x128xf32>
    %c5 = arith.constant 5 : index
    %c0_103 = arith.constant 0 : index
    %c0_104 = arith.constant 0 : index
    %428 = vector.load %arg5[%c5, %c0_103, %c0_104] : memref<6x8x128xf32, #tpu.memory_space<vmem>>, vector<1x8x128xf32>
    %429 = vector.shape_cast %428 : vector<1x8x128xf32> to vector<8x128xf32>
    %430 = vector.shape_cast %427 : vector<8x128xf32> to vector<1x8x128xf32>
    tpu.vector_store %arg5[%c5, %c0_103, %c0_104], %430 {strides = array<i32>} : memref<6x8x128xf32, #tpu.memory_space<vmem>>, vector<1x8x128xf32>,
    %431 = vector.shape_cast %422 : vector<8x1xi32> to vector<8x1xi32>
    %432 = vector.broadcast %431 : vector<8x1xi32> to vector<8x128xi32>
    %c5_105 = arith.constant 5 : index
    %c0_106 = arith.constant 0 : index
    %c0_107 = arith.constant 0 : index
    %433 = vector.load %arg6[%c5_105, %c0_106, %c0_107] : memref<6x8x128xi32, #tpu.memory_space<vmem>>, vector<1x8x128xi32>
    %434 = vector.shape_cast %433 : vector<1x8x128xi32> to vector<8x128xi32>
    %435 = vector.shape_cast %432 : vector<8x128xi32> to vector<1x8x128xi32>
    tpu.vector_store %arg6[%c5_105, %c0_106, %c0_107], %435 {strides = array<i32>} : memref<6x8x128xi32, #tpu.memory_space<vmem>>, vector<1x8x128xi32>,
    return
  }
  func.func @transform_0(%arg0: i32) -> (i32, i32) {
    %c0_i32 = arith.constant 0 : i32
    %c0_i32_0 = arith.constant 0 : i32
    %c0_i32_1 = arith.constant 0 : i32
    return %c0_i32, %c0_i32_0 : i32, i32
  }
  func.func @transform_1(%arg0: i32) -> (i32, i32) {
    %c0_i32 = arith.constant 0 : i32
    %c0_i32_0 = arith.constant 0 : i32
    %c0_i32_1 = arith.constant 0 : i32
    return %c0_i32, %c0_i32_0 : i32, i32
  }
  func.func @transform_2(%arg0: i32) -> (i32, i32) {
    %c0_i32 = arith.constant 0 : i32
    %c0_i32_0 = arith.constant 0 : i32
    %c0_i32_1 = arith.constant 0 : i32
    return %c0_i32, %c0_i32_0 : i32, i32
  }
  func.func @transform_3(%arg0: i32) -> (i32, i32) {
    %c0_i32 = arith.constant 0 : i32
    %c0_i32_0 = arith.constant 0 : i32
    %c0_i32_1 = arith.constant 0 : i32
    return %c0_i32, %c0_i32_0 : i32, i32
  }
  func.func @transform_4(%arg0: i32) -> (i32, i32, i32) {
    %c0_i32 = arith.constant 0 : i32
    %c0_i32_0 = arith.constant 0 : i32
    %c0_i32_1 = arith.constant 0 : i32
    %c0_i32_2 = arith.constant 0 : i32
    return %c0_i32, %c0_i32_0, %c0_i32_1 : i32, i32, i32
  }
  func.func @transform_5(%arg0: i32) -> (i32, i32, i32) {
    %c0_i32 = arith.constant 0 : i32
    %c0_i32_0 = arith.constant 0 : i32
    %c0_i32_1 = arith.constant 0 : i32
    %c0_i32_2 = arith.constant 0 : i32
    return %c0_i32, %c0_i32_0, %c0_i32_1 : i32, i32, i32
  }
}

</mosaic_0001>

<llo_original>
// kernel: tpu_custom_call.1
$region0: #{tpu_custom_call.1}
  #allocation0 [shape = 'u32[]', space=smem, size = 0x4, offset = 0x4, fixed_abs, tag = 'smem constant byte address 0x4 - core index']
  #allocation1 [shape = 'u32[72,128]{1,0:T(1,128)}', space=vmem, size = 0x9000, scoped, tag = 'internal scratch']
  %s0 = inlined_call_operand.hbm [shape: f32[8,128], index: 0, kind: input, shape index: {}]
  %s1 = inlined_call_operand.hbm [shape: bf16[128,256], index: 1, kind: input, shape index: {}]
  %s2 = inlined_call_operand.hbm [shape: f32[8,128], index: 2, kind: input, shape index: {}]
  %s3 = inlined_call_operand.hbm [shape: bf16[128,128], index: 3, kind: input, shape index: {}]
  %s4 = inlined_call_operand.hbm [shape: f32[6,8,128], index: 4, kind: output, shape index: {0}]
  %s5 = inlined_call_operand.hbm [shape: s32[6,8,128], index: 5, kind: output, shape index: {1}]
  %6 = xla_tuple %s4, %s5
  %s7 = sld [smem:[#allocation0]]
  $region50: #{tpu_custom_call.1} parent=0
    _
  %s9 = ssub.s32 1, %s7
  %s10 = scalar_select 0, %s9, %s7
  $region1: #{tpu_custom_call.1} parent=0
    #allocation2 [shape = 'u8[4096]{0}', space=vmem, size = 0x1000, scoped, tag = 'input window, operand 0, single buffered']
    #allocation3 [shape = 's32[1]{0}', space=sflag, size = 0x4, scoped, tag = 'scoped memory for tpu_custom_call.1']
    #allocation4 [shape = 's32[1]{0}', space=sflag, size = 0x4, scoped, tag = 'scoped memory for tpu_custom_call.1']
    #allocation5 [shape = 'u8[65536]{0}', space=vmem, size = 0x10000, scoped, tag = 'input window, operand 1, single buffered']
    #allocation6 [shape = 's32[1]{0}', space=sflag, size = 0x4, scoped, tag = 'scoped memory for tpu_custom_call.1']
    #allocation7 [shape = 'u8[4096]{0}', space=vmem, size = 0x1000, scoped, tag = 'input window, operand 2, single buffered']
    #allocation8 [shape = 'u8[32768]{0}', space=vmem, size = 0x8000, scoped, tag = 'input window, operand 3, single buffered']
    #allocation9 [shape = 's32[1]{0}', space=sflag, size = 0x4, scoped, tag = 'scoped memory for tpu_custom_call.1']
    #allocation10 [shape = 'u8[24576]{0}', space=vmem, size = 0x6000, scoped, tag = 'output window, operand 0, single buffered']
    #allocation11 [shape = 'u8[24576]{0}', space=vmem, size = 0x6000, scoped, tag = 'output window, operand 1, single buffered']
    #allocation12 [shape = 's32[1]{0}', space=sflag, size = 0x4, scoped, tag = 'scoped memory for tpu_custom_call.1']
    %11 = vsyncpa [#allocation3], 0
    %12 = vsyncpa [#allocation6], 0
    %13 = vsyncpa [#allocation9], 0
    %14 = vsyncpa [#allocation4], 0
    %15 = vsyncpa [#allocation12], 0
    // Predicated region
    $region2: #{tpu_custom_call.1} parent=1 // pred_check
      _
    $region3: #{tpu_custom_call.1} parent=1 // pred_check_branch
      %17 = sbr.rel (0) target = $region5
    $region4: #{tpu_custom_call.1} parent=1 // pred_region
      %19 = vsyncadd [#allocation3], 0
      %s21 = sshll.u32 %s0, 4
      %s22 = int_to_ptr.hbm [resolvable:$true] %s21
      %s23 = sshll.u32 [#allocation2], 4
      %s24 = int_to_ptr.vmem [resolvable:$true] %s23
      %26 = dma.hbm_to_vmem [thread:$0]  %s22, 128, %s24, [#allocation3]
    $region5: #{tpu_custom_call.1} parent=1 // pred_fallthru
      _
    // Predicated region
    $region6: #{tpu_custom_call.1} parent=1 // pred_check
      _
    $region7: #{tpu_custom_call.1} parent=1 // pred_check_branch
      %28 = sbr.rel (0) target = $region9
    $region8: #{tpu_custom_call.1} parent=1 // pred_region
      %30 = vsyncadd [#allocation6], 0
      %s31 = sshll.u32 %s1, 4
      %s32 = int_to_ptr.hbm [resolvable:$true] %s31
      %s33 = sshll.u32 [#allocation5], 4
      %s34 = int_to_ptr.vmem [resolvable:$true] %s33
      %39 = dma.hbm_to_vmem [thread:$0]  %s32, 2048, %s34, [#allocation6], 128, 128, 8
    $region9: #{tpu_custom_call.1} parent=1 // pred_fallthru
      _
    // Predicated region
    $region10: #{tpu_custom_call.1} parent=1 // pred_check
      _
    $region11: #{tpu_custom_call.1} parent=1 // pred_check_branch
      %41 = sbr.rel (0) target = $region13
    $region12: #{tpu_custom_call.1} parent=1 // pred_region
      %43 = vsyncadd [#allocation6], 0
      %s45 = sshll.u32 %s2, 4
      %s46 = int_to_ptr.hbm [resolvable:$true] %s45
      %s47 = sshll.u32 [#allocation7], 4
      %s48 = int_to_ptr.vmem [resolvable:$true] %s47
      %50 = dma.hbm_to_vmem [thread:$0]  %s46, 128, %s48, [#allocation6]
    $region13: #{tpu_custom_call.1} parent=1 // pred_fallthru
      _
    // Predicated region
    $region14: #{tpu_custom_call.1} parent=1 // pred_check
      _
    $region15: #{tpu_custom_call.1} parent=1 // pred_check_branch
      %52 = sbr.rel (0) target = $region17
    $region16: #{tpu_custom_call.1} parent=1 // pred_region
      %54 = vsyncadd [#allocation9], 0
      %s55 = sshll.u32 %s3, 4
      %s56 = int_to_ptr.hbm [resolvable:$true] %s55
      %s57 = sshll.u32 [#allocation8], 4
      %s58 = int_to_ptr.vmem [resolvable:$true] %s57
      %63 = dma.hbm_to_vmem [thread:$0]  %s56, 1024, %s58, [#allocation9], 64, 64, 4
    $region17: #{tpu_custom_call.1} parent=1 // pred_fallthru
      _
    // Predicated region
    $region18: #{tpu_custom_call.1} parent=1 // pred_check
      _
    $region19: #{tpu_custom_call.1} parent=1 // pred_check_branch
      %65 = sbr.rel (0) target = $region21
    $region20: #{tpu_custom_call.1} parent=1 // pred_region
      %67 = dma.done [#allocation3], 128
    $region21: #{tpu_custom_call.1} parent=1 // pred_fallthru
      _
    // Predicated region
    $region22: #{tpu_custom_call.1} parent=1 // pred_check
      _
    $region23: #{tpu_custom_call.1} parent=1 // pred_check_branch
      %69 = sbr.rel (0) target = $region25
    $region24: #{tpu_custom_call.1} parent=1 // pred_region
      %71 = dma.done [#allocation6], 2048
    $region25: #{tpu_custom_call.1} parent=1 // pred_fallthru
      _
    // Predicated region
    $region26: #{tpu_custom_call.1} parent=1 // pred_check
      _
    $region27: #{tpu_custom_call.1} parent=1 // pred_check_branch
      %73 = sbr.rel (0) target = $region29
    $region28: #{tpu_custom_call.1} parent=1 // pred_region
      %75 = dma.done [#allocation6], 128
    $region29: #{tpu_custom_call.1} parent=1 // pred_fallthru
      _
    // Predicated region
    $region30: #{tpu_custom_call.1} parent=1 // pred_check
      _
    $region31: #{tpu_custom_call.1} parent=1 // pred_check_branch
      %77 = sbr.rel (0) target = $region33
    $region32: #{tpu_custom_call.1} parent=1 // pred_region
      %79 = dma.done [#allocation9], 1024
    $region33: #{tpu_custom_call.1} parent=1 // pred_fallthru
      _
    %v80 = vld [vmem:[#allocation5] sm:$0xff]
    %v81 = vld [vmem:[#allocation5 + $0x8] sm:$0xff]
    %v82 = vld [vmem:[#allocation5 + $0x10] sm:$0xff]
    %v83 = vld [vmem:[#allocation5 + $0x18] sm:$0xff]
    %v84 = vld [vmem:[#allocation5 + $0x20] sm:$0xff]
    %v85 = vld [vmem:[#allocation5 + $0x28] sm:$0xff]
    %v86 = vld [vmem:[#allocation5 + $0x30] sm:$0xff]
    %v87 = vld [vmem:[#allocation5 + $0x38] sm:$0xff]
    %v88 = vld [vmem:[#allocation5 + $0x40] sm:$0xff]
    %v89 = vld [vmem:[#allocation5 + $0x48] sm:$0xff]
    %v90 = vld [vmem:[#allocation5 + $0x50] sm:$0xff]
    %v91 = vld [vmem:[#allocation5 + $0x58] sm:$0xff]
    %v92 = vld [vmem:[#allocation5 + $0x60] sm:$0xff]
    %v93 = vld [vmem:[#allocation5 + $0x68] sm:$0xff]
    %v94 = vld [vmem:[#allocation5 + $0x70] sm:$0xff]
    %v95 = vld [vmem:[#allocation5 + $0x78] sm:$0xff]
    %v96 = vld [vmem:[#allocation7] sm:$0xff]
    %v97 = vld [vmem:[#allocation8] sm:$0xf]
    %v98 = vld [vmem:[#allocation8 + $0x4] sm:$0xf]
    %v99 = vld [vmem:[#allocation8 + $0x8] sm:$0xf]
    %v100 = vld [vmem:[#allocation8 + $0xc] sm:$0xf]
    %v101 = vld [vmem:[#allocation8 + $0x10] sm:$0xf]
    %v102 = vld [vmem:[#allocation8 + $0x14] sm:$0xf]
    %v103 = vld [vmem:[#allocation8 + $0x18] sm:$0xf]
    %v104 = vld [vmem:[#allocation8 + $0x1c] sm:$0xf]
    %v105 = vld [vmem:[#allocation8 + $0x20] sm:$0xf]
    %v106 = vld [vmem:[#allocation8 + $0x24] sm:$0xf]
    %v107 = vld [vmem:[#allocation8 + $0x28] sm:$0xf]
    %v108 = vld [vmem:[#allocation8 + $0x2c] sm:$0xf]
    %v109 = vld [vmem:[#allocation8 + $0x30] sm:$0xf]
    %v110 = vld [vmem:[#allocation8 + $0x34] sm:$0xf]
    %v111 = vld [vmem:[#allocation8 + $0x38] sm:$0xf]
    %v112 = vld [vmem:[#allocation8 + $0x3c] sm:$0xf]
    %v113 = vlaneseq
    %v114 = vshrl.u32 %v113, 7
    %v115 = vlaneseq
    %v116 = vand.u32 %v115, 127
    %vm117 = vcmp.ge.s32.totalorder %v114, 4
    %v118 = vsel %vm117, 1, 0
    %v119 = vmul.u32 %v118, 128
    %v120 = vadd.s32 %v119, %v116
    %v121 = vld [vmem:[#allocation2] sm:$0xff]
    %vm122 = vcmp.lt.s32.totalorder %v114, 4
    %v123 = vsel %vm122, 0.0, 1e+09
    %v124 = vpack.c.bf16 %v121, %v121
    %v141 = vunpack.c.l.b16 %v80
    %v142 = vunpack.c.h.b16 %v80
    %v143 = vunpack.c.l.b16 %v81
    %v144 = vunpack.c.h.b16 %v81
    %v145 = vunpack.c.l.b16 %v82
    %v146 = vunpack.c.h.b16 %v82
    %v147 = vunpack.c.l.b16 %v83
    %v148 = vunpack.c.h.b16 %v83
    %v149 = vunpack.c.l.b16 %v84
    %v150 = vunpack.c.h.b16 %v84
    %v151 = vunpack.c.l.b16 %v85
    %v152 = vunpack.c.h.b16 %v85
    %v153 = vunpack.c.l.b16 %v86
    %v154 = vunpack.c.h.b16 %v86
    %v155 = vunpack.c.l.b16 %v87
    %v156 = vunpack.c.h.b16 %v87
    %v157 = vunpack.c.l.b16 %v88
    %v158 = vunpack.c.h.b16 %v88
    %v159 = vunpack.c.l.b16 %v89
    %v160 = vunpack.c.h.b16 %v89
    %v161 = vunpack.c.l.b16 %v90
    %v162 = vunpack.c.h.b16 %v90
    %v163 = vunpack.c.l.b16 %v91
    %v164 = vunpack.c.h.b16 %v91
    %v165 = vunpack.c.l.b16 %v92
    %v166 = vunpack.c.h.b16 %v92
    %v167 = vunpack.c.l.b16 %v93
    %v168 = vunpack.c.h.b16 %v93
    %v169 = vunpack.c.l.b16 %v94
    %v170 = vunpack.c.h.b16 %v94
    %v171 = vunpack.c.l.b16 %v95
    %v172 = vunpack.c.h.b16 %v95
    %v173 = vpack.c.b16 %v143, %v141
    %v174 = vpack.c.b16 %v144, %v142
    %v175 = vpack.c.b16 %v147, %v145
    %v176 = vpack.c.b16 %v148, %v146
    %v177 = vpack.c.b16 %v151, %v149
    %v178 = vpack.c.b16 %v152, %v150
    %v179 = vpack.c.b16 %v155, %v153
    %v180 = vpack.c.b16 %v156, %v154
    %v181 = vpack.c.b16 %v159, %v157
    %v182 = vpack.c.b16 %v160, %v158
    %v183 = vpack.c.b16 %v163, %v161
    %v184 = vpack.c.b16 %v164, %v162
    %v185 = vpack.c.b16 %v167, %v165
    %v186 = vpack.c.b16 %v168, %v166
    %v187 = vpack.c.b16 %v171, %v169
    %v188 = vpack.c.b16 %v172, %v170
    %205 = vmatpush.bf16.msra.mxu0 %v187
    %206 = vmatpush.bf16.msra.mxu0 %v185
    %207 = vmatpush.bf16.msra.mxu0 %v183
    %208 = vmatpush.bf16.msra.mxu0 %v181
    %209 = vmatpush.bf16.msra.mxu0 %v179
    %210 = vmatpush.bf16.msra.mxu0 %v177
    %211 = vmatpush.bf16.msra.mxu0 %v175
    %212 = vmatpush.bf16.msra.mxu0 %v173
    %213 = vmatmul.bf16.gmra.mxu0 %v124
    %v214 = vpop.f32.mrf.mxu0
    %v215 = vadd.f32 0.0, %v214
    %v216 = vpop.f32.mrf.mxu0
    %217 = vdwg.mxu0
    %218 = vmatpush.bf16.msra.mxu0 %v188
    %219 = vmatpush.bf16.msra.mxu0 %v186
    %220 = vmatpush.bf16.msra.mxu0 %v184
    %221 = vmatpush.bf16.msra.mxu0 %v182
    %222 = vmatpush.bf16.msra.mxu0 %v180
    %223 = vmatpush.bf16.msra.mxu0 %v178
    %224 = vmatpush.bf16.msra.mxu0 %v176
    %225 = vmatpush.bf16.msra.mxu0 %v174
    %226 = vmatmul.bf16.gmra.mxu0 %v124
    %v227 = vpop.f32.mrf.mxu0
    %v228 = vadd.f32 0.0, %v227
    %v229 = vpop.f32.mrf.mxu0
    %230 = vdwg.mxu0
    %v231 = vadd.f32 %v215, %v96
    %232 = vmax.xlane.f32.xlu0 %v231
    %v233 = vpop.xlane.xlu0 %232
    %v234 = vsub.f32 %v231, %v233
    %v235 = vmul.f32 %v234, 1.442695
    %v236 = vpow.pop %v235
    %237 = vadd.xlane.f32.xlu0 %v236
    %v238 = vpop.xlane.xlu0 %237
    %v239 = vlog2.pop %v238
    %v240 = vmul.f32 %v239, 0.6931472
    %v241 = vadd.f32 %v233, %v240
    %v242 = vadd.f32 %v123, %v241
    %v243 = vsub.f32 %v242, %v231
    %v245 = vand.u32 %v243, 4294967040
    %v246 = vor.u32 %v245, %v120
    %v247 = vand.u32 %v246, 65535
    %v248 = vshra.s32 %v246, 16
    %v249 = vcvt.s32.f32 %v247
    %v250 = vcvt.s32.f32 %v248
    %251 = vmin.xlane.f32.xlu0 %v250
    %v252 = vpop.xlane.xlu0 %251
    %vm253 = vcmp.eq.f32.partialorder %v250, %v252
    %v254 = vsel %vm253, %v249, inf
    %255 = vmin.xlane.f32.xlu0 %v254
    %v256 = vpop.xlane.xlu0 %255
    %v257 = vcvt.f32.s32 %v256
    %v258 = vcvt.f32.s32 %v252
    %v259 = vshll.u32 %v258, 16
    %v260 = vadd.s32 %v259, %v257
    %v261 = vrot.slane %v260, 4
    %vm262 = vcmp.lt.s32.totalorder %v260, %v261
    %v263 = vsel %vm262, %v260, %v261
    %v264 = vrot.slane %v263, 4
    %vm265 = vcmask 1043456
    %v266 = vsel %vm265, %v263, %v264
    %267 = vset.pattern.permute.xlu0 0
    %268 = vperm.xlu0 %267, %v266
    %v269 = vpop.permute.xlu0 %268
    %vm270 = vcmp.eq.s32.totalorder %v246, %v269
    %v271 = vsel %vm270, 2147483647, %v246
    %v272 = vand.u32 %v271, 65535
    %v273 = vshra.s32 %v271, 16
    %v274 = vcvt.s32.f32 %v272
    %v275 = vcvt.s32.f32 %v273
    %276 = vmin.xlane.f32.xlu0 %v275
    %v277 = vpop.xlane.xlu0 %276
    %vm278 = vcmp.eq.f32.partialorder %v275, %v277
    %v279 = vsel %vm278, %v274, inf
    %280 = vmin.xlane.f32.xlu0 %v279
    %v281 = vpop.xlane.xlu0 %280
    %v282 = vcvt.f32.s32 %v281
    %v283 = vcvt.f32.s32 %v277
    %v284 = vshll.u32 %v283, 16
    %v285 = vadd.s32 %v284, %v282
    %v286 = vrot.slane %v285, 4
    %vm287 = vcmp.lt.s32.totalorder %v285, %v286
    %v288 = vsel %vm287, %v285, %v286
    %v289 = vrot.slane %v288, 4
    %v290 = vsel %vm265, %v263, %v289
    %v291 = vand.u32 %v290, 255
    %v292 = vand.u32 %v290, 4294967040
    %v294 = vshra.s32 %v291, 7
    %v295 = vand.u32 %v291, 127
    %v297 = vrot.slane %v228, 4
    %v299 = vsel %vm265, %v228, %v297
    %v300 = vsel %vm265, %v297, %v228
    %vm301 = vcmp.eq.s32.totalorder %v294, 1
    %v302 = vsel %vm301, 1, 0
    %303 = vset.pattern.permute.xlu0 0
    %304 = vperm.xlu0 %303, %v302
    %v305 = vpop.permute.xlu0 %304
    %vm306 = vcmp.eq.s32.totalorder %v305, 1
    %v307 = vsel %vm306, %v300, %v299
    %308 = vset.pattern.permute.xlu0 0
    %309 = vperm.xlu0 %308, %v295
    %v310 = vpop.permute.xlu0 %309
    %vm311 = vcmp.eq.s32.totalorder %v116, %v310
    %v312 = vsel %vm311, 1, 0
    %v313 = vcvt.s32.f32 %v312
    %v314 = vpack.c.bf16 %v313, %v313
    %v331 = vunpack.c.l.b16 %v97
    %v332 = vunpack.c.l.b16 %v98
    %v333 = vunpack.c.l.b16 %v99
    %v334 = vunpack.c.l.b16 %v100
    %v335 = vunpack.c.l.b16 %v101
    %v336 = vunpack.c.l.b16 %v102
    %v337 = vunpack.c.l.b16 %v103
    %v338 = vunpack.c.l.b16 %v104
    %v339 = vunpack.c.l.b16 %v105
    %v340 = vunpack.c.l.b16 %v106
    %v341 = vunpack.c.l.b16 %v107
    %v342 = vunpack.c.l.b16 %v108
    %v343 = vunpack.c.l.b16 %v109
    %v344 = vunpack.c.l.b16 %v110
    %v345 = vunpack.c.l.b16 %v111
    %v346 = vunpack.c.l.b16 %v112
    %v347 = vpack.c.b16 %v332, %v331
    %v348 = vpack.c.b16 %v334, %v333
    %v349 = vpack.c.b16 %v336, %v335
    %v350 = vpack.c.b16 %v338, %v337
    %v351 = vpack.c.b16 %v340, %v339
    %v352 = vpack.c.b16 %v342, %v341
    %v353 = vpack.c.b16 %v344, %v343
    %v354 = vpack.c.b16 %v346, %v345
    %363 = vmatpush.bf16.msra.mxu0 %v354
    %364 = vmatpush.bf16.msra.mxu0 %v353
    %365 = vmatpush.bf16.msra.mxu0 %v352
    %366 = vmatpush.bf16.msra.mxu0 %v351
    %367 = vmatpush.bf16.msra.mxu0 %v350
    %368 = vmatpush.bf16.msra.mxu0 %v349
    %369 = vmatpush.bf16.msra.mxu0 %v348
    %370 = vmatpush.bf16.msra.mxu0 %v347
    %371 = vmatmul.bf16.gmra.mxu0 %v314
    %v372 = vpop.f32.mrf.mxu0
    %v373 = vadd.f32 0.0, %v372
    %v374 = vpop.f32.mrf.mxu0
    %375 = vdwg.mxu0
    %v376 = vadd.f32 %v307, %v373
    %v377 = vtanh.pop %v376
    %378 = vset.pattern.permute.xlu0 0
    %379 = vperm.xlu0 %378, %v292
    %v380 = vpop.permute.xlu0 %379
    %382 = vst [vmem:[#allocation10] sm:$0xff] %v380
    %383 = vset.pattern.permute.xlu0 0
    %384 = vperm.xlu0 %383, %v291
    %v385 = vpop.permute.xlu0 %384
    %386 = vst [vmem:[#allocation11] sm:$0xff] %v385
    %v387 = vpack.c.bf16 %v377, %v377
    %388 = vmatpush.bf16.msra.mxu0 %v187
    %389 = vmatpush.bf16.msra.mxu0 %v185
    %390 = vmatpush.bf16.msra.mxu0 %v183
    %391 = vmatpush.bf16.msra.mxu0 %v181
    %392 = vmatpush.bf16.msra.mxu0 %v179
    %393 = vmatpush.bf16.msra.mxu0 %v177
    %394 = vmatpush.bf16.msra.mxu0 %v175
    %395 = vmatpush.bf16.msra.mxu0 %v173
    %396 = vmatmul.bf16.gmra.mxu0 %v387
    %v397 = vpop.f32.mrf.mxu0
    %v398 = vadd.f32 0.0, %v397
    %v399 = vpop.f32.mrf.mxu0
    %400 = vdwg.mxu0
    %401 = vmatpush.bf16.msra.mxu0 %v188
    %402 = vmatpush.bf16.msra.mxu0 %v186
    %403 = vmatpush.bf16.msra.mxu0 %v184
    %404 = vmatpush.bf16.msra.mxu0 %v182
    %405 = vmatpush.bf16.msra.mxu0 %v180
    %406 = vmatpush.bf16.msra.mxu0 %v178
    %407 = vmatpush.bf16.msra.mxu0 %v176
    %408 = vmatpush.bf16.msra.mxu0 %v174
    %409 = vmatmul.bf16.gmra.mxu0 %v387
    %v410 = vpop.f32.mrf.mxu0
    %v411 = vadd.f32 0.0, %v410
    %v412 = vpop.f32.mrf.mxu0
    %413 = vdwg.mxu0
    %v414 = vadd.f32 %v398, %v96
    %415 = vmax.xlane.f32.xlu0 %v414
    %v416 = vpop.xlane.xlu0 %415
    %v417 = vsub.f32 %v414, %v416
    %v418 = vmul.f32 %v417, 1.442695
    %v419 = vpow.pop %v418
    %420 = vadd.xlane.f32.xlu0 %v419
    %v421 = vpop.xlane.xlu0 %420
    %v422 = vlog2.pop %v421
    %v423 = vmul.f32 %v422, 0.6931472
    %v424 = vadd.f32 %v416, %v423
    %v425 = vadd.f32 %v292, %v424
    %427 = vset.pattern.permute.xlu0 0
    %428 = vperm.xlu0 %427, %v425
    %v429 = vpop.permute.xlu0 %428
    %v431 = vsub.f32 %v429, %v414
    %v433 = vand.u32 %v431, 4294967040
    %v434 = vor.u32 %v433, %v120
    %v435 = vand.u32 %v434, 65535
    %v436 = vshra.s32 %v434, 16
    %v437 = vcvt.s32.f32 %v435
    %v438 = vcvt.s32.f32 %v436
    %439 = vmin.xlane.f32.xlu0 %v438
    %v440 = vpop.xlane.xlu0 %439
    %vm441 = vcmp.eq.f32.partialorder %v438, %v440
    %v442 = vsel %vm441, %v437, inf
    %443 = vmin.xlane.f32.xlu0 %v442
    %v444 = vpop.xlane.xlu0 %443
    %v445 = vcvt.f32.s32 %v444
    %v446 = vcvt.f32.s32 %v440
    %v447 = vshll.u32 %v446, 16
    %v448 = vadd.s32 %v447, %v445
    %v449 = vrot.slane %v448, 4
    %vm450 = vcmp.lt.s32.totalorder %v448, %v449
    %v451 = vsel %vm450, %v448, %v449
    %v452 = vrot.slane %v451, 4
    %v453 = vsel %vm265, %v451, %v452
    %454 = vset.pattern.permute.xlu0 0
    %455 = vperm.xlu0 %454, %v453
    %v456 = vpop.permute.xlu0 %455
    %vm457 = vcmp.eq.s32.totalorder %v434, %v456
    %v458 = vsel %vm457, 2147483647, %v434
    %v459 = vand.u32 %v458, 65535
    %v460 = vshra.s32 %v458, 16
    %v461 = vcvt.s32.f32 %v459
    %v462 = vcvt.s32.f32 %v460
    %463 = vmin.xlane.f32.xlu0 %v462
    %v464 = vpop.xlane.xlu0 %463
    %vm465 = vcmp.eq.f32.partialorder %v462, %v464
    %v466 = vsel %vm465, %v461, inf
    %467 = vmin.xlane.f32.xlu0 %v466
    %v468 = vpop.xlane.xlu0 %467
    %v469 = vcvt.f32.s32 %v468
    %v470 = vcvt.f32.s32 %v464
    %v471 = vshll.u32 %v470, 16
    %v472 = vadd.s32 %v471, %v469
    %v473 = vrot.slane %v472, 4
    %vm474 = vcmp.lt.s32.totalorder %v472, %v473
    %v475 = vsel %vm474, %v472, %v473
    %v476 = vrot.slane %v475, 4
    %v477 = vsel %vm265, %v451, %v476
    %v478 = vand.u32 %v477, 255
    %v479 = vand.u32 %v477, 4294967040
    %v481 = vshra.s32 %v478, 7
    %v482 = vand.u32 %v478, 127
    %v484 = vrot.slane %v411, 4
    %v486 = vsel %vm265, %v411, %v484
    %v487 = vsel %vm265, %v484, %v411
    %vm488 = vcmp.eq.s32.totalorder %v481, 1
    %v489 = vsel %vm488, 1, 0
    %490 = vset.pattern.permute.xlu0 0
    %491 = vperm.xlu0 %490, %v489
    %v492 = vpop.permute.xlu0 %491
    %vm493 = vcmp.eq.s32.totalorder %v492, 1
    %v494 = vsel %vm493, %v487, %v486
    %495 = vset.pattern.permute.xlu0 0
    %496 = vperm.xlu0 %495, %v482
    %v497 = vpop.permute.xlu0 %496
    %vm498 = vcmp.eq.s32.totalorder %v116, %v497
    %v499 = vsel %vm498, 1, 0
    %v500 = vcvt.s32.f32 %v499
    %v501 = vpack.c.bf16 %v500, %v500
    %502 = vmatpush.bf16.msra.mxu0 %v354
    %503 = vmatpush.bf16.msra.mxu0 %v353
    %504 = vmatpush.bf16.msra.mxu0 %v352
    %505 = vmatpush.bf16.msra.mxu0 %v351
    %506 = vmatpush.bf16.msra.mxu0 %v350
    %507 = vmatpush.bf16.msra.mxu0 %v349
    %508 = vmatpush.bf16.msra.mxu0 %v348
    %509 = vmatpush.bf16.msra.mxu0 %v347
    %510 = vmatmul.bf16.gmra.mxu0 %v501
    %v511 = vpop.f32.mrf.mxu0
    %v512 = vadd.f32 0.0, %v511
    %v513 = vpop.f32.mrf.mxu0
    %514 = vdwg.mxu0
    %v515 = vadd.f32 %v494, %v512
    %v516 = vtanh.pop %v515
    %517 = vset.pattern.permute.xlu0 0
    %518 = vperm.xlu0 %517, %v479
    %v519 = vpop.permute.xlu0 %518
    %s521 = scalar_lea.vmem [#allocation10], 8
    %522 = vst [vmem:[%s521] sm:$0xff] %v519
    %523 = vset.pattern.permute.xlu0 0
    %524 = vperm.xlu0 %523, %v478
    %v525 = vpop.permute.xlu0 %524
    %s526 = scalar_lea.vmem [#allocation11], 8
    %527 = vst [vmem:[%s526] sm:$0xff] %v525
    %v528 = vpack.c.bf16 %v516, %v516
    %529 = vmatpush.bf16.msra.mxu0 %v187
    %530 = vmatpush.bf16.msra.mxu0 %v185
    %531 = vmatpush.bf16.msra.mxu0 %v183
    %532 = vmatpush.bf16.msra.mxu0 %v181
    %533 = vmatpush.bf16.msra.mxu0 %v179
    %534 = vmatpush.bf16.msra.mxu0 %v177
    %535 = vmatpush.bf16.msra.mxu0 %v175
    %536 = vmatpush.bf16.msra.mxu0 %v173
    %537 = vmatmul.bf16.gmra.mxu0 %v528
    %v538 = vpop.f32.mrf.mxu0
    %v539 = vadd.f32 0.0, %v538
    %v540 = vpop.f32.mrf.mxu0
    %541 = vdwg.mxu0
    %542 = vmatpush.bf16.msra.mxu0 %v188
    %543 = vmatpush.bf16.msra.mxu0 %v186
    %544 = vmatpush.bf16.msra.mxu0 %v184
    %545 = vmatpush.bf16.msra.mxu0 %v182
    %546 = vmatpush.bf16.msra.mxu0 %v180
    %547 = vmatpush.bf16.msra.mxu0 %v178
    %548 = vmatpush.bf16.msra.mxu0 %v176
    %549 = vmatpush.bf16.msra.mxu0 %v174
    %550 = vmatmul.bf16.gmra.mxu0 %v528
    %v551 = vpop.f32.mrf.mxu0
    %v552 = vadd.f32 0.0, %v551
    %v553 = vpop.f32.mrf.mxu0
    %554 = vdwg.mxu0
    %v555 = vadd.f32 %v539, %v96
    %556 = vmax.xlane.f32.xlu0 %v555
    %v557 = vpop.xlane.xlu0 %556
    %v558 = vsub.f32 %v555, %v557
    %v559 = vmul.f32 %v558, 1.442695
    %v560 = vpow.pop %v559
    %561 = vadd.xlane.f32.xlu0 %v560
    %v562 = vpop.xlane.xlu0 %561
    %v563 = vlog2.pop %v562
    %v564 = vmul.f32 %v563, 0.6931472
    %v565 = vadd.f32 %v557, %v564
    %v566 = vadd.f32 %v479, %v565
    %568 = vset.pattern.permute.xlu0 0
    %569 = vperm.xlu0 %568, %v566
    %v570 = vpop.permute.xlu0 %569
    %v572 = vsub.f32 %v570, %v555
    %v574 = vand.u32 %v572, 4294967040
    %v575 = vor.u32 %v574, %v120
    %v576 = vand.u32 %v575, 65535
    %v577 = vshra.s32 %v575, 16
    %v578 = vcvt.s32.f32 %v576
    %v579 = vcvt.s32.f32 %v577
    %580 = vmin.xlane.f32.xlu0 %v579
    %v581 = vpop.xlane.xlu0 %580
    %vm582 = vcmp.eq.f32.partialorder %v579, %v581
    %v583 = vsel %vm582, %v578, inf
    %584 = vmin.xlane.f32.xlu0 %v583
    %v585 = vpop.xlane.xlu0 %584
    %v586 = vcvt.f32.s32 %v585
    %v587 = vcvt.f32.s32 %v581
    %v588 = vshll.u32 %v587, 16
    %v589 = vadd.s32 %v588, %v586
    %v590 = vrot.slane %v589, 4
    %vm591 = vcmp.lt.s32.totalorder %v589, %v590
    %v592 = vsel %vm591, %v589, %v590
    %v593 = vrot.slane %v592, 4
    %v594 = vsel %vm265, %v592, %v593
    %595 = vset.pattern.permute.xlu0 0
    %596 = vperm.xlu0 %595, %v594
    %v597 = vpop.permute.xlu0 %596
    %vm598 = vcmp.eq.s32.totalorder %v575, %v597
    %v599 = vsel %vm598, 2147483647, %v575
    %v600 = vand.u32 %v599, 65535
    %v601 = vshra.s32 %v599, 16
    %v602 = vcvt.s32.f32 %v600
    %v603 = vcvt.s32.f32 %v601
    %604 = vmin.xlane.f32.xlu0 %v603
    %v605 = vpop.xlane.xlu0 %604
    %vm606 = vcmp.eq.f32.partialorder %v603, %v605
    %v607 = vsel %vm606, %v602, inf
    %608 = vmin.xlane.f32.xlu0 %v607
    %v609 = vpop.xlane.xlu0 %608
    %v610 = vcvt.f32.s32 %v609
    %v611 = vcvt.f32.s32 %v605
    %v612 = vshll.u32 %v611, 16
    %v613 = vadd.s32 %v612, %v610
    %v614 = vrot.slane %v613, 4
    %vm615 = vcmp.lt.s32.totalorder %v613, %v614
    %v616 = vsel %vm615, %v613, %v614
    %v617 = vrot.slane %v616, 4
    %v618 = vsel %vm265, %v592, %v617
    %v619 = vand.u32 %v618, 255
    %v620 = vand.u32 %v618, 4294967040
    %v622 = vshra.s32 %v619, 7
    %v623 = vand.u32 %v619, 127
    %v625 = vrot.slane %v552, 4
    %v627 = vsel %vm265, %v552, %v625
    %v628 = vsel %vm265, %v625, %v552
    %vm629 = vcmp.eq.s32.totalorder %v622, 1
    %v630 = vsel %vm629, 1, 0
    %631 = vset.pattern.permute.xlu0 0
    %632 = vperm.xlu0 %631, %v630
    %v633 = vpop.permute.xlu0 %632
    %vm634 = vcmp.eq.s32.totalorder %v633, 1
    %v635 = vsel %vm634, %v628, %v627
    %636 = vset.pattern.permute.xlu0 0
    %637 = vperm.xlu0 %636, %v623
    %v638 = vpop.permute.xlu0 %637
    %vm639 = vcmp.eq.s32.totalorder %v116, %v638
    %v640 = vsel %vm639, 1, 0
    %v641 = vcvt.s32.f32 %v640
    %v642 = vpack.c.bf16 %v641, %v641
    %643 = vmatpush.bf16.msra.mxu0 %v354
    %644 = vmatpush.bf16.msra.mxu0 %v353
    %645 = vmatpush.bf16.msra.mxu0 %v352
    %646 = vmatpush.bf16.msra.mxu0 %v351
    %647 = vmatpush.bf16.msra.mxu0 %v350
    %648 = vmatpush.bf16.msra.mxu0 %v349
    %649 = vmatpush.bf16.msra.mxu0 %v348
    %650 = vmatpush.bf16.msra.mxu0 %v347
    %651 = vmatmul.bf16.gmra.mxu0 %v642
    %v652 = vpop.f32.mrf.mxu0
    %v653 = vadd.f32 0.0, %v652
    %v654 = vpop.f32.mrf.mxu0
    %655 = vdwg.mxu0
    %v656 = vadd.f32 %v635, %v653
    %v657 = vtanh.pop %v656
    %658 = vset.pattern.permute.xlu0 0
    %659 = vperm.xlu0 %658, %v620
    %v660 = vpop.permute.xlu0 %659
    %s662 = scalar_lea.vmem [#allocation10], 16
    %663 = vst [vmem:[%s662] sm:$0xff] %v660
    %664 = vset.pattern.permute.xlu0 0
    %665 = vperm.xlu0 %664, %v619
    %v666 = vpop.permute.xlu0 %665
    %s667 = scalar_lea.vmem [#allocation11], 16
    %668 = vst [vmem:[%s667] sm:$0xff] %v666
    %v669 = vpack.c.bf16 %v657, %v657
    %670 = vmatpush.bf16.msra.mxu0 %v187
    %671 = vmatpush.bf16.msra.mxu0 %v185
    %672 = vmatpush.bf16.msra.mxu0 %v183
    %673 = vmatpush.bf16.msra.mxu0 %v181
    %674 = vmatpush.bf16.msra.mxu0 %v179
    %675 = vmatpush.bf16.msra.mxu0 %v177
    %676 = vmatpush.bf16.msra.mxu0 %v175
    %677 = vmatpush.bf16.msra.mxu0 %v173
    %678 = vmatmul.bf16.gmra.mxu0 %v669
    %v679 = vpop.f32.mrf.mxu0
    %v680 = vadd.f32 0.0, %v679
    %v681 = vpop.f32.mrf.mxu0
    %682 = vdwg.mxu0
    %683 = vmatpush.bf16.msra.mxu0 %v188
    %684 = vmatpush.bf16.msra.mxu0 %v186
    %685 = vmatpush.bf16.msra.mxu0 %v184
    %686 = vmatpush.bf16.msra.mxu0 %v182
    %687 = vmatpush.bf16.msra.mxu0 %v180
    %688 = vmatpush.bf16.msra.mxu0 %v178
    %689 = vmatpush.bf16.msra.mxu0 %v176
    %690 = vmatpush.bf16.msra.mxu0 %v174
    %691 = vmatmul.bf16.gmra.mxu0 %v669
    %v692 = vpop.f32.mrf.mxu0
    %v693 = vadd.f32 0.0, %v692
    %v694 = vpop.f32.mrf.mxu0
    %695 = vdwg.mxu0
    %v696 = vadd.f32 %v680, %v96
    %697 = vmax.xlane.f32.xlu0 %v696
    %v698 = vpop.xlane.xlu0 %697
    %v699 = vsub.f32 %v696, %v698
    %v700 = vmul.f32 %v699, 1.442695
    %v701 = vpow.pop %v700
    %702 = vadd.xlane.f32.xlu0 %v701
    %v703 = vpop.xlane.xlu0 %702
    %v704 = vlog2.pop %v703
    %v705 = vmul.f32 %v704, 0.6931472
    %v706 = vadd.f32 %v698, %v705
    %v707 = vadd.f32 %v620, %v706
    %709 = vset.pattern.permute.xlu0 0
    %710 = vperm.xlu0 %709, %v707
    %v711 = vpop.permute.xlu0 %710
    %v713 = vsub.f32 %v711, %v696
    %v715 = vand.u32 %v713, 4294967040
    %v716 = vor.u32 %v715, %v120
    %v717 = vand.u32 %v716, 65535
    %v718 = vshra.s32 %v716, 16
    %v719 = vcvt.s32.f32 %v717
    %v720 = vcvt.s32.f32 %v718
    %721 = vmin.xlane.f32.xlu0 %v720
    %v722 = vpop.xlane.xlu0 %721
    %vm723 = vcmp.eq.f32.partialorder %v720, %v722
    %v724 = vsel %vm723, %v719, inf
    %725 = vmin.xlane.f32.xlu0 %v724
    %v726 = vpop.xlane.xlu0 %725
    %v727 = vcvt.f32.s32 %v726
    %v728 = vcvt.f32.s32 %v722
    %v729 = vshll.u32 %v728, 16
    %v730 = vadd.s32 %v729, %v727
    %v731 = vrot.slane %v730, 4
    %vm732 = vcmp.lt.s32.totalorder %v730, %v731
    %v733 = vsel %vm732, %v730, %v731
    %v734 = vrot.slane %v733, 4
    %v735 = vsel %vm265, %v733, %v734
    %736 = vset.pattern.permute.xlu0 0
    %737 = vperm.xlu0 %736, %v735
    %v738 = vpop.permute.xlu0 %737
    %vm739 = vcmp.eq.s32.totalorder %v716, %v738
    %v740 = vsel %vm739, 2147483647, %v716
    %v741 = vand.u32 %v740, 65535
    %v742 = vshra.s32 %v740, 16
    %v743 = vcvt.s32.f32 %v741
    %v744 = vcvt.s32.f32 %v742
    %745 = vmin.xlane.f32.xlu0 %v744
    %v746 = vpop.xlane.xlu0 %745
    %vm747 = vcmp.eq.f32.partialorder %v744, %v746
    %v748 = vsel %vm747, %v743, inf
    %749 = vmin.xlane.f32.xlu0 %v748
    %v750 = vpop.xlane.xlu0 %749
    %v751 = vcvt.f32.s32 %v750
    %v752 = vcvt.f32.s32 %v746
    %v753 = vshll.u32 %v752, 16
    %v754 = vadd.s32 %v753, %v751
    %v755 = vrot.slane %v754, 4
    %vm756 = vcmp.lt.s32.totalorder %v754, %v755
    %v757 = vsel %vm756, %v754, %v755
    %v758 = vrot.slane %v757, 4
    %v759 = vsel %vm265, %v733, %v758
    %v760 = vand.u32 %v759, 255
    %v761 = vand.u32 %v759, 4294967040
    %v763 = vshra.s32 %v760, 7
    %v764 = vand.u32 %v760, 127
    %v766 = vrot.slane %v693, 4
    %v768 = vsel %vm265, %v693, %v766
    %v769 = vsel %vm265, %v766, %v693
    %vm770 = vcmp.eq.s32.totalorder %v763, 1
    %v771 = vsel %vm770, 1, 0
    %772 = vset.pattern.permute.xlu0 0
    %773 = vperm.xlu0 %772, %v771
    %v774 = vpop.permute.xlu0 %773
    %vm775 = vcmp.eq.s32.totalorder %v774, 1
    %v776 = vsel %vm775, %v769, %v768
    %777 = vset.pattern.permute.xlu0 0
    %778 = vperm.xlu0 %777, %v764
    %v779 = vpop.permute.xlu0 %778
    %vm780 = vcmp.eq.s32.totalorder %v116, %v779
    %v781 = vsel %vm780, 1, 0
    %v782 = vcvt.s32.f32 %v781
    %v783 = vpack.c.bf16 %v782, %v782
    %784 = vmatpush.bf16.msra.mxu0 %v354
    %785 = vmatpush.bf16.msra.mxu0 %v353
    %786 = vmatpush.bf16.msra.mxu0 %v352
    %787 = vmatpush.bf16.msra.mxu0 %v351
    %788 = vmatpush.bf16.msra.mxu0 %v350
    %789 = vmatpush.bf16.msra.mxu0 %v349
    %790 = vmatpush.bf16.msra.mxu0 %v348
    %791 = vmatpush.bf16.msra.mxu0 %v347
    %792 = vmatmul.bf16.gmra.mxu0 %v783
    %v793 = vpop.f32.mrf.mxu0
    %v794 = vadd.f32 0.0, %v793
    %v795 = vpop.f32.mrf.mxu0
    %796 = vdwg.mxu0
    %v797 = vadd.f32 %v776, %v794
    %v798 = vtanh.pop %v797
    %799 = vset.pattern.permute.xlu0 0
    %800 = vperm.xlu0 %799, %v761
    %v801 = vpop.permute.xlu0 %800
    %s803 = scalar_lea.vmem [#allocation10], 24
    %804 = vst [vmem:[%s803] sm:$0xff] %v801
    %805 = vset.pattern.permute.xlu0 0
    %806 = vperm.xlu0 %805, %v760
    %v807 = vpop.permute.xlu0 %806
    %s808 = scalar_lea.vmem [#allocation11], 24
    %809 = vst [vmem:[%s808] sm:$0xff] %v807
    %v810 = vpack.c.bf16 %v798, %v798
    %811 = vmatpush.bf16.msra.mxu0 %v187
    %812 = vmatpush.bf16.msra.mxu0 %v185
    %813 = vmatpush.bf16.msra.mxu0 %v183
    %814 = vmatpush.bf16.msra.mxu0 %v181
    %815 = vmatpush.bf16.msra.mxu0 %v179
    %816 = vmatpush.bf16.msra.mxu0 %v177
    %817 = vmatpush.bf16.msra.mxu0 %v175
    %818 = vmatpush.bf16.msra.mxu0 %v173
    %819 = vmatmul.bf16.gmra.mxu0 %v810
    %v820 = vpop.f32.mrf.mxu0
    %v821 = vadd.f32 0.0, %v820
    %v822 = vpop.f32.mrf.mxu0
    %823 = vdwg.mxu0
    %824 = vmatpush.bf16.msra.mxu0 %v188
    %825 = vmatpush.bf16.msra.mxu0 %v186
    %826 = vmatpush.bf16.msra.mxu0 %v184
    %827 = vmatpush.bf16.msra.mxu0 %v182
    %828 = vmatpush.bf16.msra.mxu0 %v180
    %829 = vmatpush.bf16.msra.mxu0 %v178
    %830 = vmatpush.bf16.msra.mxu0 %v176
    %831 = vmatpush.bf16.msra.mxu0 %v174
    %832 = vmatmul.bf16.gmra.mxu0 %v810
    %v833 = vpop.f32.mrf.mxu0
    %v834 = vadd.f32 0.0, %v833
    %v835 = vpop.f32.mrf.mxu0
    %836 = vdwg.mxu0
    %v837 = vadd.f32 %v821, %v96
    %838 = vmax.xlane.f32.xlu0 %v837
    %v839 = vpop.xlane.xlu0 %838
    %v840 = vsub.f32 %v837, %v839
    %v841 = vmul.f32 %v840, 1.442695
    %v842 = vpow.pop %v841
    %843 = vadd.xlane.f32.xlu0 %v842
    %v844 = vpop.xlane.xlu0 %843
    %v845 = vlog2.pop %v844
    %v846 = vmul.f32 %v845, 0.6931472
    %v847 = vadd.f32 %v839, %v846
    %v848 = vadd.f32 %v761, %v847
    %850 = vset.pattern.permute.xlu0 0
    %851 = vperm.xlu0 %850, %v848
    %v852 = vpop.permute.xlu0 %851
    %v854 = vsub.f32 %v852, %v837
    %v856 = vand.u32 %v854, 4294967040
    %v857 = vor.u32 %v856, %v120
    %v858 = vand.u32 %v857, 65535
    %v859 = vshra.s32 %v857, 16
    %v860 = vcvt.s32.f32 %v858
    %v861 = vcvt.s32.f32 %v859
    %862 = vmin.xlane.f32.xlu0 %v861
    %v863 = vpop.xlane.xlu0 %862
    %vm864 = vcmp.eq.f32.partialorder %v861, %v863
    %v865 = vsel %vm864, %v860, inf
    %866 = vmin.xlane.f32.xlu0 %v865
    %v867 = vpop.xlane.xlu0 %866
    %v868 = vcvt.f32.s32 %v867
    %v869 = vcvt.f32.s32 %v863
    %v870 = vshll.u32 %v869, 16
    %v871 = vadd.s32 %v870, %v868
    %v872 = vrot.slane %v871, 4
    %vm873 = vcmp.lt.s32.totalorder %v871, %v872
    %v874 = vsel %vm873, %v871, %v872
    %v875 = vrot.slane %v874, 4
    %v876 = vsel %vm265, %v874, %v875
    %877 = vset.pattern.permute.xlu0 0
    %878 = vperm.xlu0 %877, %v876
    %v879 = vpop.permute.xlu0 %878
    %vm880 = vcmp.eq.s32.totalorder %v857, %v879
    %v881 = vsel %vm880, 2147483647, %v857
    %v882 = vand.u32 %v881, 65535
    %v883 = vshra.s32 %v881, 16
    %v884 = vcvt.s32.f32 %v882
    %v885 = vcvt.s32.f32 %v883
    %886 = vmin.xlane.f32.xlu0 %v885
    %v887 = vpop.xlane.xlu0 %886
    %vm888 = vcmp.eq.f32.partialorder %v885, %v887
    %v889 = vsel %vm888, %v884, inf
    %890 = vmin.xlane.f32.xlu0 %v889
    %v891 = vpop.xlane.xlu0 %890
    %v892 = vcvt.f32.s32 %v891
    %v893 = vcvt.f32.s32 %v887
    %v894 = vshll.u32 %v893, 16
    %v895 = vadd.s32 %v894, %v892
    %v896 = vrot.slane %v895, 4
    %vm897 = vcmp.lt.s32.totalorder %v895, %v896
    %v898 = vsel %vm897, %v895, %v896
    %v899 = vrot.slane %v898, 4
    %v900 = vsel %vm265, %v874, %v899
    %v901 = vand.u32 %v900, 255
    %v902 = vand.u32 %v900, 4294967040
    %v904 = vshra.s32 %v901, 7
    %v905 = vand.u32 %v901, 127
    %v907 = vrot.slane %v834, 4
    %v909 = vsel %vm265, %v834, %v907
    %v910 = vsel %vm265, %v907, %v834
    %vm911 = vcmp.eq.s32.totalorder %v904, 1
    %v912 = vsel %vm911, 1, 0
    %913 = vset.pattern.permute.xlu0 0
    %914 = vperm.xlu0 %913, %v912
    %v915 = vpop.permute.xlu0 %914
    %vm916 = vcmp.eq.s32.totalorder %v915, 1
    %v917 = vsel %vm916, %v910, %v909
    %918 = vset.pattern.permute.xlu0 0
    %919 = vperm.xlu0 %918, %v905
    %v920 = vpop.permute.xlu0 %919
    %vm921 = vcmp.eq.s32.totalorder %v116, %v920
    %v922 = vsel %vm921, 1, 0
    %v923 = vcvt.s32.f32 %v922
    %v924 = vpack.c.bf16 %v923, %v923
    %925 = vmatpush.bf16.msra.mxu0 %v354
    %926 = vmatpush.bf16.msra.mxu0 %v353
    %927 = vmatpush.bf16.msra.mxu0 %v352
    %928 = vmatpush.bf16.msra.mxu0 %v351
    %929 = vmatpush.bf16.msra.mxu0 %v350
    %930 = vmatpush.bf16.msra.mxu0 %v349
    %931 = vmatpush.bf16.msra.mxu0 %v348
    %932 = vmatpush.bf16.msra.mxu0 %v347
    %933 = vmatmul.bf16.gmra.mxu0 %v924
    %v934 = vpop.f32.mrf.mxu0
    %v935 = vadd.f32 0.0, %v934
    %v936 = vpop.f32.mrf.mxu0
    %937 = vdwg.mxu0
    %v938 = vadd.f32 %v917, %v935
    %v939 = vtanh.pop %v938
    %940 = vset.pattern.permute.xlu0 0
    %941 = vperm.xlu0 %940, %v902
    %v942 = vpop.permute.xlu0 %941
    %s944 = scalar_lea.vmem [#allocation10], 32
    %945 = vst [vmem:[%s944] sm:$0xff] %v942
    %946 = vset.pattern.permute.xlu0 0
    %947 = vperm.xlu0 %946, %v901
    %v948 = vpop.permute.xlu0 %947
    %s949 = scalar_lea.vmem [#allocation11], 32
    %950 = vst [vmem:[%s949] sm:$0xff] %v948
    %v951 = vpack.c.bf16 %v939, %v939
    %952 = vmatpush.bf16.msra.mxu0 %v187
    %953 = vmatpush.bf16.msra.mxu0 %v185
    %954 = vmatpush.bf16.msra.mxu0 %v183
    %955 = vmatpush.bf16.msra.mxu0 %v181
    %956 = vmatpush.bf16.msra.mxu0 %v179
    %957 = vmatpush.bf16.msra.mxu0 %v177
    %958 = vmatpush.bf16.msra.mxu0 %v175
    %959 = vmatpush.bf16.msra.mxu0 %v173
    %960 = vmatmul.bf16.gmra.mxu0 %v951
    %v961 = vpop.f32.mrf.mxu0
    %v962 = vadd.f32 0.0, %v961
    %v963 = vpop.f32.mrf.mxu0
    %964 = vdwg.mxu0
    %v965 = vadd.f32 %v962, %v96
    %966 = vmax.xlane.f32.xlu0 %v965
    %v967 = vpop.xlane.xlu0 %966
    %v968 = vsub.f32 %v965, %v967
    %v969 = vmul.f32 %v968, 1.442695
    %v970 = vpow.pop %v969
    %971 = vadd.xlane.f32.xlu0 %v970
    %v972 = vpop.xlane.xlu0 %971
    %v973 = vlog2.pop %v972
    %v974 = vmul.f32 %v973, 0.6931472
    %v975 = vadd.f32 %v967, %v974
    %v976 = vadd.f32 %v902, %v975
    %978 = vset.pattern.permute.xlu0 0
    %979 = vperm.xlu0 %978, %v976
    %v980 = vpop.permute.xlu0 %979
    %v982 = vsub.f32 %v980, %v965
    %v984 = vand.u32 %v982, 4294967040
    %v985 = vor.u32 %v984, %v120
    %v986 = vand.u32 %v985, 65535
    %v987 = vshra.s32 %v985, 16
    %v988 = vcvt.s32.f32 %v986
    %v989 = vcvt.s32.f32 %v987
    %990 = vmin.xlane.f32.xlu0 %v989
    %v991 = vpop.xlane.xlu0 %990
    %vm992 = vcmp.eq.f32.partialorder %v989, %v991
    %v993 = vsel %vm992, %v988, inf
    %994 = vmin.xlane.f32.xlu0 %v993
    %v995 = vpop.xlane.xlu0 %994
    %v996 = vcvt.f32.s32 %v995
    %v997 = vcvt.f32.s32 %v991
    %v998 = vshll.u32 %v997, 16
    %v999 = vadd.s32 %v998, %v996
    %v1000 = vrot.slane %v999, 4
    %vm1001 = vcmp.lt.s32.totalorder %v999, %v1000
    %v1002 = vsel %vm1001, %v999, %v1000
    %v1003 = vrot.slane %v1002, 4
    %v1004 = vsel %vm265, %v1002, %v1003
    %1005 = vset.pattern.permute.xlu0 0
    %1006 = vperm.xlu0 %1005, %v1004
    %v1007 = vpop.permute.xlu0 %1006
    %vm1008 = vcmp.eq.s32.totalorder %v985, %v1007
    %v1009 = vsel %vm1008, 2147483647, %v985
    %v1010 = vand.u32 %v1009, 65535
    %v1011 = vshra.s32 %v1009, 16
    %v1012 = vcvt.s32.f32 %v1010
    %v1013 = vcvt.s32.f32 %v1011
    %1014 = vmin.xlane.f32.xlu0 %v1013
    %v1015 = vpop.xlane.xlu0 %1014
    %vm1016 = vcmp.eq.f32.partialorder %v1013, %v1015
    %v1017 = vsel %vm1016, %v1012, inf
    %1018 = vmin.xlane.f32.xlu0 %v1017
    %v1019 = vpop.xlane.xlu0 %1018
    %v1020 = vcvt.f32.s32 %v1019
    %v1021 = vcvt.f32.s32 %v1015
    %v1022 = vshll.u32 %v1021, 16
    %v1023 = vadd.s32 %v1022, %v1020
    %v1024 = vrot.slane %v1023, 4
    %vm1025 = vcmp.lt.s32.totalorder %v1023, %v1024
    %v1026 = vsel %vm1025, %v1023, %v1024
    %v1027 = vrot.slane %v1026, 4
    %v1028 = vsel %vm265, %v1002, %v1027
    %v1029 = vand.u32 %v1028, 255
    %v1030 = vand.u32 %v1028, 4294967040
    %1031 = vset.pattern.permute.xlu0 0
    %1032 = vperm.xlu0 %1031, %v1030
    %v1033 = vpop.permute.xlu0 %1032
    %s1035 = scalar_lea.vmem [#allocation10], 40
    %1036 = vst [vmem:[%s1035] sm:$0xff] %v1033
    %1037 = vset.pattern.permute.xlu0 0
    %1038 = vperm.xlu0 %1037, %v1029
    %v1039 = vpop.permute.xlu0 %1038
    %s1040 = scalar_lea.vmem [#allocation11], 40
    %1041 = vst [vmem:[%s1040] sm:$0xff] %v1039
    // Predicated region
    $region34: #{tpu_custom_call.1} parent=1 // pred_check
      _
    $region35: #{tpu_custom_call.1} parent=1 // pred_check_branch
      %1043 = sbr.rel (0) target = $region37
    $region36: #{tpu_custom_call.1} parent=1 // pred_region
      %1045 = vsyncadd [#allocation4], 0
      %s1046 = sshll.u32 [#allocation10], 4
      %s1047 = int_to_ptr.vmem [resolvable:$true] %s1046
      %s1048 = sshll.u32 %s4, 4
      %s1049 = int_to_ptr.hbm [resolvable:$true] %s1048
      %1054 = dma.vmem_to_hbm [thread:$0]  %s1047, 768, %s1049, [#allocation4], 128, 128, 8
    $region37: #{tpu_custom_call.1} parent=1 // pred_fallthru
      _
    // Predicated region
    $region38: #{tpu_custom_call.1} parent=1 // pred_check
      _
    $region39: #{tpu_custom_call.1} parent=1 // pred_check_branch
      %1056 = sbr.rel (0) target = $region41
    $region40: #{tpu_custom_call.1} parent=1 // pred_region
      %1058 = vsyncadd [#allocation12], 0
      %s1059 = sshll.u32 [#allocation11], 4
      %s1060 = int_to_ptr.vmem [resolvable:$true] %s1059
      %s1061 = sshll.u32 %s5, 4
      %s1062 = int_to_ptr.hbm [resolvable:$true] %s1061
      %1067 = dma.vmem_to_hbm [thread:$0]  %s1060, 768, %s1062, [#allocation12], 128, 128, 8
    $region41: #{tpu_custom_call.1} parent=1 // pred_fallthru
      _
    // Predicated region
    $region42: #{tpu_custom_call.1} parent=1 // pred_check
      _
    $region43: #{tpu_custom_call.1} parent=1 // pred_check_branch
      %1069 = sbr.rel (0) target = $region45
    $region44: #{tpu_custom_call.1} parent=1 // pred_region
      %1071 = dma.done [#allocation4], 768
    $region45: #{tpu_custom_call.1} parent=1 // pred_fallthru
      _
    // Predicated region
    $region46: #{tpu_custom_call.1} parent=1 // pred_check
      _
    $region47: #{tpu_custom_call.1} parent=1 // pred_check_branch
      %1073 = sbr.rel (0) target = $region49
    $region48: #{tpu_custom_call.1} parent=1 // pred_region
      %1075 = dma.done [#allocation12], 768
    $region49: #{tpu_custom_call.1} parent=1 // pred_fallthru
      _
    %1076 = vsyncpa [#allocation3], 1
    %1077 = vsyncpa [#allocation6], 1
    %1078 = vsyncpa [#allocation9], 1
    %1079 = vsyncpa [#allocation4], 1
    %1080 = vsyncpa [#allocation12], 1

</llo_original>
